<compile_context>
chip_gen: v5e
topology: v5e:2x2
jax: 0.10.0
libtpu: 0.0.40
codegen_flags: <defaults>
</compile_context>

<pallas_src>
import jax
import jax.numpy as jnp
from jax.experimental import pallas as pl
from jax.experimental.pallas import tpu as pltpu

# ----------------------------- configuration -------------------------------
N = 2              # batch
H = W = 16         # spatial
HW = H * W
CIN = 3            # image channels
KRAW = 9 * CIN     # 3x3 im2col patch length = 27
KPAD = 32          # padded contraction: col 27 = 1.0 (bias), cols 28..31 = 0
FEAT = 512         # resnet18 fc.in_features (backbone feature dim)
NETOUT = 16        # args.networkoutput
H1 = 32            # args.hlayer1
H2 = 16            # args.hlayer2
FC1 = 100          # fclayer1 out (folded away at parameter time)
NUM_CLASSES = 3    # args.num_classes
CLIN_IN = 3        # clinical features
BN_EPS = 1e-5

# packed-slab layouts
WSLAB_ROWS = 48                     # bf16: rows 0..31 conv_w (+bias row 27), 32..34 wi^T
PSLAB_ROWS = 80                     # f32, 8-row-aligned regions, 128 lanes
R_C1W, R_C1B, R_C2W, R_C2B, R_WC, R_BO = 0, 8, 16, 48, 56, 72


# ------------------------------ Pallas kernel -------------------------------
def combine_kernel(patches_ref, wslab_ref, pslab_ref, clin_ref, out_ref):
    f32, bf16 = jnp.float32, jnp.bfloat16
    nb = out_ref.shape[0]

    # ---- image branch: conv3x3 as im2col matmul (bias in padded-K row) + ReLU
    conv_w = wslab_ref[0:KPAD, :]                                    # [32, 512] bf16
    conv = jnp.maximum(
        jnp.dot(patches_ref[...], conv_w, preferred_element_type=f32), 0.0)  # [nb*HW, FEAT]

    # global average pool: single reshape + sublane reduction (1/HW folded into wi)
    feat = conv.reshape(nb, HW, FEAT).sum(axis=1)                    # [nb, FEAT] f32

    # image head: model.fc -> fclayer1[:NETOUT] -> fclayer2, all pre-folded into wi^T
    wit = wslab_ref[KPAD:WSLAB_ROWS, :]                              # [16, 512] bf16 (rows >= 3 zero)
    o_img = jax.lax.dot_general(
        feat.astype(bf16), wit, (((1,), (1,)), ((), ())),
        preferred_element_type=f32)                                  # [nb, 16]

    # ---- clinical branch: (Linear + eval-BN + ReLU) x2, Dropout = identity
    w1 = pslab_ref[R_C1W:R_C1W + 8, :][:CLIN_IN, :H1]                # [3, 32]
    b1 = pslab_ref[R_C1B:R_C1B + 8, :][:1, :H1]                      # [1, 32]
    w2 = pslab_ref[R_C2W:R_C2W + H1, :][:, :H2]                      # [32, 16]
    b2 = pslab_ref[R_C2B:R_C2B + 8, :][:1, :H2]                      # [1, 16]
    wc = pslab_ref[R_WC:R_WC + H2, :][:, :NUM_CLASSES]               # [16, 3]  (fclayer2 folded)
    bo = pslab_ref[R_BO:R_BO + 8, :][:1, :NUM_CLASSES]               # [1, 3]   (all biases folded)

    clin = clin_ref[...]                                             # [nb, 3]
    z1 = jnp.maximum(jnp.dot(clin.astype(bf16), w1.astype(bf16),
                             preferred_element_type=f32) + b1, 0.0)  # [nb, 32]
    z2 = jnp.maximum(jnp.dot(z1.astype(bf16), w2.astype(bf16),
                             preferred_element_type=f32) + b2, 0.0)  # [nb, 16]
    o_clin = jnp.dot(z2.astype(bf16), wc.astype(bf16),
                     preferred_element_type=f32)                     # [nb, 3]

    out_ref[...] = o_img[:, :NUM_CLASSES] + o_clin + bo              # [nb, 3]


# ------------------------------- glue helpers ------------------------------
def im2col_raw(x_nchw):
    """[N, C, H, W] -> [N*H*W, 9*C] patches for a 3x3 / stride 1 / pad 1 conv."""
    # NOTE: (dy, dx)-outer / channel-inner ordering; a real pretrained OIHW conv
    # weight would need a permutation to match this ordering.
    x = jnp.transpose(x_nchw, (0, 2, 3, 1))                    # NHWC
    xp = jnp.pad(x, ((0, 0), (1, 1), (1, 1), (0, 0)))
    cols = []
    for dy in range(3):
        for dx in range(3):
            cols.append(xp[:, dy:dy + H, dx:dx + W, :])
    patches = jnp.concatenate(cols, axis=-1)                   # [N, H, W, 9*C]
    return patches.reshape(N * HW, KRAW).astype(jnp.float32)


def build_patches(x_nchw):
    """im2col + bias column (1.0) + zero pad to KPAD, cast to bf16."""
    p = im2col_raw(x_nchw)
    ones = jnp.ones((N * HW, 1), jnp.float32)
    zeros = jnp.zeros((N * HW, KPAD - KRAW - 1), jnp.float32)
    return jnp.concatenate([p, ones, zeros], axis=-1).astype(jnp.bfloat16)


def linear_params(key, fan_in, fan_out):
    """PyTorch nn.Linear default init; returns (W [fan_in, fan_out], b [1, fan_out])."""
    kw, kb = jax.random.split(key)
    bound = 1.0 / jnp.sqrt(float(fan_in))
    w = jax.random.uniform(kw, (fan_in, fan_out), jnp.float32, -bound, bound)
    b = jax.random.uniform(kb, (1, fan_out), jnp.float32, -bound, bound)
    return w, b


def bn_params(dim):
    """PyTorch BatchNorm1d default init (eval mode): gamma=1, beta=0, mean=0, var=1."""
    return (jnp.ones((1, dim), jnp.float32), jnp.zeros((1, dim), jnp.float32),
            jnp.zeros((1, dim), jnp.float32), jnp.ones((1, dim), jnp.float32))


def make_params(key):
    keys = jax.random.split(key, 6)
    conv_w, conv_b = linear_params(keys[0], KRAW, FEAT)     # backbone stand-in conv
    fc_w, fc_b = linear_params(keys[1], FEAT, NETOUT)       # model.fc Linear
    c1_w, c1_b = linear_params(keys[2], CLIN_IN, H1)        # clinical Linear(3, H1)
    c2_w, c2_b = linear_params(keys[3], H1, H2)             # clinical Linear(H1, H2)
    f1_w, f1_b = linear_params(keys[4], NETOUT + H2, FC1)   # fclayer1
    f2_w, f2_b = linear_params(keys[5], FC1, NUM_CLASSES)   # fclayer2
    return dict(conv_w=conv_w, conv_b=conv_b, fc_w=fc_w, fc_b=fc_b,
                c1_w=c1_w, c1_b=c1_b, bn1=bn_params(H1),
                c2_w=c2_w, c2_b=c2_b, bn2=bn_params(H2),
                f1_w=f1_w, f1_b=f1_b, f2_w=f2_w, f2_b=f2_b)


def fold_params(p):
    """One-time folding: conv bias into padded K, eval-BN into Linears, model.fc +
    fclayer2 + 1/HW pooling scale into the two head weights, then pack into 2 slabs."""
    f32 = jnp.float32

    def fold_bn(w, b, bn):
        gamma, beta, mean, var = bn
        s = gamma * jax.lax.rsqrt(var + BN_EPS)
        return w * s, b * s + beta - mean * s

    c1_w, c1_b = fold_bn(p["c1_w"], p["c1_b"], p["bn1"])       # [3,32], [1,32]
    c2_w, c2_b = fold_bn(p["c2_w"], p["c2_b"], p["bn2"])       # [32,16], [1,16]

    # split fclayer1 weight along its input axis: image-fc rows, clinical rows
    # (relies on torch.cat([image_fc, clinical], dim=1) ordering)
    f1_wi = p["f1_w"][:NETOUT]                                 # [NETOUT, FC1]
    f1_wc = p["f1_w"][NETOUT:]                                 # [H2, FC1]

    # fold model.fc and fclayer2 into the heads (no nonlinearity between
    # fclayer1 and fclayer2; Dropout is eval-mode identity), and 1/HW (mean pool)
    wi = (p["fc_w"] @ f1_wi @ p["f2_w"]) / float(HW)           # [FEAT, 3]
    wc = f1_wc @ p["f2_w"]                                     # [H2, 3]
    bo = (p["f1_b"] + p["fc_b"] @ f1_wi) @ p["f2_w"] + p["f2_b"]   # [1, 3]

    # bf16 weight slab: conv_w (bias folded into padded-K row 27) + wi^T
    conv_w_pad = jnp.concatenate(
        [p["conv_w"], p["conv_b"], jnp.zeros((KPAD - KRAW - 1, FEAT), f32)], axis=0)
    wslab = jnp.zeros((WSLAB_ROWS, FEAT), f32)
    wslab = wslab.at[0:KPAD].set(conv_w_pad)
    wslab = wslab.at[KPAD:KPAD + NUM_CLASSES].set(wi.T)
    wslab = wslab.astype(jnp.bfloat16)                         # [48, 512] bf16

    # f32 param slab: remaining small params in 8-row-aligned regions
    pslab = jnp.zeros((PSLAB_ROWS, 128), f32)
    pslab = pslab.at[R_C1W:R_C1W + CLIN_IN, 0:H1].set(c1_w)
    pslab = pslab.at[R_C1B:R_C1B + 1, 0:H1].set(c1_b)
    pslab = pslab.at[R_C2W:R_C2W + H1, 0:H2].set(c2_w)
    pslab = pslab.at[R_C2B:R_C2B + 1, 0:H2].set(c2_b)
    pslab = pslab.at[R_WC:R_WC + H2, 0:NUM_CLASSES].set(wc)
    pslab = pslab.at[R_BO:R_BO + 1, 0:NUM_CLASSES].set(bo)     # [80, 128] f32

    return dict(wslab=wslab, pslab=pslab)


def reference_forward(img, clinical, p):
    """Pure-JAX f32 reference with the unfused params (validates all foldings)."""
    patches = im2col_raw(img)
    conv = jnp.maximum(patches @ p["conv_w"] + p["conv_b"], 0.0)
    feat = jnp.mean(conv.reshape(N, HW, FEAT), axis=1)
    fc = feat @ p["fc_w"] + p["fc_b"]
    g1, b1, m1, v1 = p["bn1"]
    z1 = clinical @ p["c1_w"] + p["c1_b"]
    z1 = jnp.maximum((z1 - m1) * jax.lax.rsqrt(v1 + BN_EPS) * g1 + b1, 0.0)
    g2, b2, m2, v2 = p["bn2"]
    z2 = z1 @ p["c2_w"] + p["c2_b"]
    z2 = jnp.maximum((z2 - m2) * jax.lax.rsqrt(v2 + BN_EPS) * g2 + b2, 0.0)
    cat = jnp.concatenate([fc, z2], axis=1)
    o1 = cat @ p["f1_w"] + p["f1_b"]
    return o1 @ p["f2_w"] + p["f2_b"]


# ---------------------------------- forward ---------------------------------
@jax.jit
def forward(img, clinical, fp):
    patches = build_patches(img)                               # [N*HW, KPAD] bf16
    vmem = pl.BlockSpec(memory_space=pltpu.MemorySpace.VMEM)
    # Single whole-array invocation (no grid): the kernel is launch/DMA-latency
    # bound at N=2; a core-sharded grid only duplicates weight DMAs.
    return pl.pallas_call(
        combine_kernel,
        out_shape=jax.ShapeDtypeStruct((N, NUM_CLASSES), jnp.float32),
        in_specs=[vmem, vmem, vmem, vmem],
        out_specs=vmem,
    )(patches, fp["wslab"], fp["pslab"], clinical.astype(jnp.float32))


# ----------------------------------- main -----------------------------------
if __name__ == "__main__":
    key = jax.random.PRNGKey(0)
    k_img, k_clin, k_params = jax.random.split(key, 3)

    img = jax.random.normal(k_img, (N, CIN, H, W), jnp.float32)        # NCHW like PyTorch
    clinical = jax.random.normal(k_clin, (N, CLIN_IN), jnp.float32)
    params = make_params(k_params)
    folded = fold_params(params)

    out = jax.block_until_ready(forward(img, clinical, folded))
    ref = reference_forward(img, clinical, params)

    assert out.shape == (N, NUM_CLASSES)
    assert bool(jnp.all(jnp.isfinite(out)))
    # bf16-cast error budget is ~1e-3 on O(0.1) outputs -> 1e-2 is a safe, tight bound
    assert bool(jnp.allclose(out, ref, atol=1e-2, rtol=1e-2)), "mismatch vs f32 reference"
    print("KERNEL_OK")
</pallas_src>

<mosaic_0001>
module attributes {stable_mosaic.version = 11 : i64} {
  func.func @combine_kernel(%arg0: memref<512x32xbf16, #tpu.memory_space<vmem>>, %arg1: memref<48x512xbf16, #tpu.memory_space<vmem>>, %arg2: memref<80x128xf32, #tpu.memory_space<vmem>>, %arg3: memref<2x3xf32, #tpu.memory_space<vmem>>, %arg4: memref<2x3xf32, #tpu.memory_space<vmem>>) attributes {dimension_semantics = [], scalar_prefetch = 0 : i64, scratch_operands = 0 : i64, tpu.core_type = #tpu.core_type<tc>} {
    %c0 = arith.constant 0 : index
    %c0_0 = arith.constant 0 : index
    %0 = vector.load %arg1[%c0, %c0_0] : memref<48x512xbf16, #tpu.memory_space<vmem>>, vector<32x512xbf16>
    %c0_1 = arith.constant 0 : index
    %c0_2 = arith.constant 0 : index
    %1 = vector.load %arg0[%c0_1, %c0_2] : memref<512x32xbf16, #tpu.memory_space<vmem>>, vector<512x32xbf16>
    %cst = arith.constant dense<0.000000e+00> : vector<512x512xf32>
    %2 = tpu.matmul %1, %0, %cst {dimension_numbers = #tpu.dot_dimension_numbers<[1], [0], [0], [1], [0, 0, 1, 1], [], []>} : vector<512x32xbf16>, vector<32x512xbf16>, vector<512x512xf32> -> vector<512x512xf32>
    %cst_3 = arith.constant 0.000000e+00 : f32
    %3 = vector.broadcast %cst_3 : f32 to vector<512x512xf32>
    %4 = arith.maximumf %2, %3 : vector<512x512xf32>
    %5 = vector.shape_cast %4 : vector<512x512xf32> to vector<2x256x512xf32>
    %cst_4 = arith.constant dense<0.000000e+00> : vector<2x512xf32>
    %6 = vector.multi_reduction <add>, %5, %cst_4 [1] : vector<2x256x512xf32> to vector<2x512xf32>
    %c32 = arith.constant 32 : index
    %c0_5 = arith.constant 0 : index
    %7 = vector.load %arg1[%c32, %c0_5] : memref<48x512xbf16, #tpu.memory_space<vmem>>, vector<16x512xbf16>
    %8 = arith.truncf %6 : vector<2x512xf32> to vector<2x512xbf16>
    %cst_6 = arith.constant dense<0.000000e+00> : vector<2x16xf32>
    %9 = tpu.matmul %8, %7, %cst_6 {dimension_numbers = #tpu.dot_dimension_numbers<[1], [1], [0], [0], [0, 0, 1, 0], [], []>} : vector<2x512xbf16>, vector<16x512xbf16>, vector<2x16xf32> -> vector<2x16xf32>
    %c0_7 = arith.constant 0 : index
    %c0_8 = arith.constant 0 : index
    %10 = vector.load %arg2[%c0_7, %c0_8] : memref<80x128xf32, #tpu.memory_space<vmem>>, vector<8x128xf32>
    %11 = vector.extract_strided_slice %10 {offsets = [0, 0], sizes = [3, 32], strides = [1, 1]} : vector<8x128xf32> to vector<3x32xf32>
    %c8 = arith.constant 8 : index
    %c0_9 = arith.constant 0 : index
    %12 = vector.load %arg2[%c8, %c0_9] : memref<80x128xf32, #tpu.memory_space<vmem>>, vector<8x128xf32>
    %13 = vector.extract_strided_slice %12 {offsets = [0, 0], sizes = [1, 32], strides = [1, 1]} : vector<8x128xf32> to vector<1x32xf32>
    %c16 = arith.constant 16 : index
    %c0_10 = arith.constant 0 : index
    %14 = vector.load %arg2[%c16, %c0_10] : memref<80x128xf32, #tpu.memory_space<vmem>>, vector<32x128xf32>
    %15 = vector.extract_strided_slice %14 {offsets = [0, 0], sizes = [32, 16], strides = [1, 1]} : vector<32x128xf32> to vector<32x16xf32>
    %c48 = arith.constant 48 : index
    %c0_11 = arith.constant 0 : index
    %16 = vector.load %arg2[%c48, %c0_11] : memref<80x128xf32, #tpu.memory_space<vmem>>, vector<8x128xf32>
    %17 = vector.extract_strided_slice %16 {offsets = [0, 0], sizes = [1, 16], strides = [1, 1]} : vector<8x128xf32> to vector<1x16xf32>
    %c56 = arith.constant 56 : index
    %c0_12 = arith.constant 0 : index
    %18 = vector.load %arg2[%c56, %c0_12] : memref<80x128xf32, #tpu.memory_space<vmem>>, vector<16x128xf32>
    %19 = vector.extract_strided_slice %18 {offsets = [0, 0], sizes = [16, 3], strides = [1, 1]} : vector<16x128xf32> to vector<16x3xf32>
    %c72 = arith.constant 72 : index
    %c0_13 = arith.constant 0 : index
    %20 = vector.load %arg2[%c72, %c0_13] : memref<80x128xf32, #tpu.memory_space<vmem>>, vector<8x128xf32>
    %21 = vector.extract_strided_slice %20 {offsets = [0, 0], sizes = [1, 3], strides = [1, 1]} : vector<8x128xf32> to vector<1x3xf32>
    %c0_14 = arith.constant 0 : index
    %c0_15 = arith.constant 0 : index
    %22 = vector.load %arg3[%c0_14, %c0_15] : memref<2x3xf32, #tpu.memory_space<vmem>>, vector<2x3xf32>
    %23 = arith.truncf %22 : vector<2x3xf32> to vector<2x3xbf16>
    %24 = arith.truncf %11 : vector<3x32xf32> to vector<3x32xbf16>
    %cst_16 = arith.constant dense<0.000000e+00> : vector<2x32xf32>
    %25 = tpu.matmul %23, %24, %cst_16 {dimension_numbers = #tpu.dot_dimension_numbers<[1], [0], [0], [1], [0, 0, 1, 1], [], []>} : vector<2x3xbf16>, vector<3x32xbf16>, vector<2x32xf32> -> vector<2x32xf32>
    %26 = vector.broadcast %13 : vector<1x32xf32> to vector<2x32xf32>
    %27 = arith.addf %25, %26 : vector<2x32xf32>
    %cst_17 = arith.constant 0.000000e+00 : f32
    %28 = vector.broadcast %cst_17 : f32 to vector<2x32xf32>
    %29 = arith.maximumf %27, %28 : vector<2x32xf32>
    %30 = arith.truncf %29 : vector<2x32xf32> to vector<2x32xbf16>
    %31 = arith.truncf %15 : vector<32x16xf32> to vector<32x16xbf16>
    %cst_18 = arith.constant dense<0.000000e+00> : vector<2x16xf32>
    %32 = tpu.matmul %30, %31, %cst_18 {dimension_numbers = #tpu.dot_dimension_numbers<[1], [0], [0], [1], [0, 0, 1, 1], [], []>} : vector<2x32xbf16>, vector<32x16xbf16>, vector<2x16xf32> -> vector<2x16xf32>
    %33 = vector.broadcast %17 : vector<1x16xf32> to vector<2x16xf32>
    %34 = arith.addf %32, %33 : vector<2x16xf32>
    %cst_19 = arith.constant 0.000000e+00 : f32
    %35 = vector.broadcast %cst_19 : f32 to vector<2x16xf32>
    %36 = arith.maximumf %34, %35 : vector<2x16xf32>
    %37 = arith.truncf %36 : vector<2x16xf32> to vector<2x16xbf16>
    %38 = arith.truncf %19 : vector<16x3xf32> to vector<16x3xbf16>
    %cst_20 = arith.constant dense<0.000000e+00> : vector<2x3xf32>
    %39 = tpu.matmul %37, %38, %cst_20 {dimension_numbers = #tpu.dot_dimension_numbers<[1], [0], [0], [1], [0, 0, 1, 1], [], []>} : vector<2x16xbf16>, vector<16x3xbf16>, vector<2x3xf32> -> vector<2x3xf32>
    %40 = vector.extract_strided_slice %9 {offsets = [0, 0], sizes = [2, 3], strides = [1, 1]} : vector<2x16xf32> to vector<2x3xf32>
    %41 = arith.addf %40, %39 : vector<2x3xf32>
    %42 = vector.broadcast %21 : vector<1x3xf32> to vector<2x3xf32>
    %43 = arith.addf %41, %42 : vector<2x3xf32>
    %c0_21 = arith.constant 0 : index
    %c0_22 = arith.constant 0 : index
    %44 = vector.load %arg4[%c0_21, %c0_22] : memref<2x3xf32, #tpu.memory_space<vmem>>, vector<2x3xf32>
    tpu.vector_store %arg4[%c0_21, %c0_22], %43 {strides = array<i32>} : memref<2x3xf32, #tpu.memory_space<vmem>>, vector<2x3xf32>,
    return
  }
}

</mosaic_0001>

<llo_original>
// kernel: forward.1
$region0: #{forward.1}
  #allocation0 [shape = 'u32[]', space=smem, size = 0x4, offset = 0x4, fixed_abs, tag = 'smem constant byte address 0x4 - core index']
  #allocation1 [shape = 'u32[72,128]{1,0:T(1,128)}', space=vmem, size = 0x9000, scoped, tag = 'internal scratch']
  %s0 = inlined_call_operand.vmem [shape: bf16[512,32], index: 0, kind: input, shape index: {}]
  %s1 = inlined_call_operand.vmem [shape: bf16[48,512], index: 1, kind: input, shape index: {}]
  %s2 = inlined_call_operand.vmem [shape: f32[80,128], index: 2, kind: input, shape index: {}]
  %s3 = inlined_call_operand.vmem [shape: f32[2,3], index: 3, kind: input, shape index: {}]
  %s4 = inlined_call_operand.hbm [shape: f32[2,3], index: 4, kind: output, shape index: {}]
  %s5 = sld [smem:[#allocation0]]
  $region26: #{forward.1} parent=0
    _
  %s7 = ssub.s32 1, %s5
  %s8 = scalar_select 0, %s7, %s5
  $region1: #{forward.1} parent=0
    #allocation2 [shape = 'u8[1024]{0}', space=vmem, size = 0x400, scoped, tag = 'output window, operand 0, single buffered']
    #allocation3 [shape = 's32[1]{0}', space=sflag, size = 0x4, scoped, tag = 'scoped memory for forward.1']
    %9 = vsyncpa [#allocation3], 0
    // Predicated region
    $region2: #{forward.1} parent=1 // pred_check
      _
    $region3: #{forward.1} parent=1 // pred_check_branch
      %11 = sbr.rel (0) target = $region5
    $region4: #{forward.1} parent=1 // pred_region
      _
    $region5: #{forward.1} parent=1 // pred_fallthru
      _
    // Predicated region
    $region6: #{forward.1} parent=1 // pred_check
      _
    $region7: #{forward.1} parent=1 // pred_check_branch
      %13 = sbr.rel (0) target = $region9
    $region8: #{forward.1} parent=1 // pred_region
      _
    $region9: #{forward.1} parent=1 // pred_fallthru
      _
    // Predicated region
    $region10: #{forward.1} parent=1 // pred_check
      _
    $region11: #{forward.1} parent=1 // pred_check_branch
      %15 = sbr.rel (0) target = $region13
    $region12: #{forward.1} parent=1 // pred_region
      _
    $region13: #{forward.1} parent=1 // pred_fallthru
      _
    // Predicated region
    $region14: #{forward.1} parent=1 // pred_check
      _
    $region15: #{forward.1} parent=1 // pred_check_branch
      %17 = sbr.rel (0) target = $region17
    $region16: #{forward.1} parent=1 // pred_region
      _
    $region17: #{forward.1} parent=1 // pred_fallthru
      _
    %v19 = vld [vmem:[%s1] sm:$0xff]
    %v20 = vld [vmem:[%s1 + $0x8] sm:$0xff]
    %v21 = vld [vmem:[%s1 + $0x10] sm:$0xff]
    %v22 = vld [vmem:[%s1 + $0x18] sm:$0xff]
    %v23 = vld [vmem:[%s1 + $0x20] sm:$0xff]
    %v24 = vld [vmem:[%s1 + $0x28] sm:$0xff]
    %v25 = vld [vmem:[%s1 + $0x30] sm:$0xff]
    %v26 = vld [vmem:[%s1 + $0x38] sm:$0xff]
    %v27 = vld [vmem:[%s0] sm:$0xf]
    %v28 = vld [vmem:[%s0 + $0x4] sm:$0xf]
    %v29 = vld [vmem:[%s0 + $0x8] sm:$0xf]
    %v30 = vld [vmem:[%s0 + $0xc] sm:$0xf]
    %v31 = vld [vmem:[%s0 + $0x10] sm:$0xf]
    %v32 = vld [vmem:[%s0 + $0x14] sm:$0xf]
    %v33 = vld [vmem:[%s0 + $0x18] sm:$0xf]
    %v34 = vld [vmem:[%s0 + $0x1c] sm:$0xf]
    %v35 = vld [vmem:[%s0 + $0x20] sm:$0xf]
    %v36 = vld [vmem:[%s0 + $0x24] sm:$0xf]
    %v37 = vld [vmem:[%s0 + $0x28] sm:$0xf]
    %v38 = vld [vmem:[%s0 + $0x2c] sm:$0xf]
    %v39 = vld [vmem:[%s0 + $0x30] sm:$0xf]
    %v40 = vld [vmem:[%s0 + $0x34] sm:$0xf]
    %v41 = vld [vmem:[%s0 + $0x38] sm:$0xf]
    %v42 = vld [vmem:[%s0 + $0x3c] sm:$0xf]
    %v43 = vld [vmem:[%s0 + $0x40] sm:$0xf]
    %v44 = vld [vmem:[%s0 + $0x44] sm:$0xf]
    %v45 = vld [vmem:[%s0 + $0x48] sm:$0xf]
    %v46 = vld [vmem:[%s0 + $0x4c] sm:$0xf]
    %v47 = vld [vmem:[%s0 + $0x50] sm:$0xf]
    %v48 = vld [vmem:[%s0 + $0x54] sm:$0xf]
    %v49 = vld [vmem:[%s0 + $0x58] sm:$0xf]
    %v50 = vld [vmem:[%s0 + $0x5c] sm:$0xf]
    %v51 = vld [vmem:[%s0 + $0x60] sm:$0xf]
    %v52 = vld [vmem:[%s0 + $0x64] sm:$0xf]
    %v53 = vld [vmem:[%s0 + $0x68] sm:$0xf]
    %v54 = vld [vmem:[%s0 + $0x6c] sm:$0xf]
    %v55 = vld [vmem:[%s0 + $0x70] sm:$0xf]
    %v56 = vld [vmem:[%s0 + $0x74] sm:$0xf]
    %v57 = vld [vmem:[%s0 + $0x78] sm:$0xf]
    %v58 = vld [vmem:[%s0 + $0x7c] sm:$0xf]
    %v59 = vld [vmem:[%s0 + $0x80] sm:$0xf]
    %v60 = vld [vmem:[%s0 + $0x84] sm:$0xf]
    %v61 = vld [vmem:[%s0 + $0x88] sm:$0xf]
    %v62 = vld [vmem:[%s0 + $0x8c] sm:$0xf]
    %v63 = vld [vmem:[%s0 + $0x90] sm:$0xf]
    %v64 = vld [vmem:[%s0 + $0x94] sm:$0xf]
    %v65 = vld [vmem:[%s0 + $0x98] sm:$0xf]
    %v66 = vld [vmem:[%s0 + $0x9c] sm:$0xf]
    %v67 = vld [vmem:[%s0 + $0xa0] sm:$0xf]
    %v68 = vld [vmem:[%s0 + $0xa4] sm:$0xf]
    %v69 = vld [vmem:[%s0 + $0xa8] sm:$0xf]
    %v70 = vld [vmem:[%s0 + $0xac] sm:$0xf]
    %v71 = vld [vmem:[%s0 + $0xb0] sm:$0xf]
    %v72 = vld [vmem:[%s0 + $0xb4] sm:$0xf]
    %v73 = vld [vmem:[%s0 + $0xb8] sm:$0xf]
    %v74 = vld [vmem:[%s0 + $0xbc] sm:$0xf]
    %v75 = vld [vmem:[%s0 + $0xc0] sm:$0xf]
    %v76 = vld [vmem:[%s0 + $0xc4] sm:$0xf]
    %v77 = vld [vmem:[%s0 + $0xc8] sm:$0xf]
    %v78 = vld [vmem:[%s0 + $0xcc] sm:$0xf]
    %v79 = vld [vmem:[%s0 + $0xd0] sm:$0xf]
    %v80 = vld [vmem:[%s0 + $0xd4] sm:$0xf]
    %v81 = vld [vmem:[%s0 + $0xd8] sm:$0xf]
    %v82 = vld [vmem:[%s0 + $0xdc] sm:$0xf]
    %v83 = vld [vmem:[%s0 + $0xe0] sm:$0xf]
    %v84 = vld [vmem:[%s0 + $0xe4] sm:$0xf]
    %v85 = vld [vmem:[%s0 + $0xe8] sm:$0xf]
    %v86 = vld [vmem:[%s0 + $0xec] sm:$0xf]
    %v87 = vld [vmem:[%s0 + $0xf0] sm:$0xf]
    %v88 = vld [vmem:[%s0 + $0xf4] sm:$0xf]
    %v89 = vld [vmem:[%s0 + $0xf8] sm:$0xf]
    %v90 = vld [vmem:[%s0 + $0xfc] sm:$0xf]
    %v155 = vunpack.c.l.b16 %v27
    %v156 = vunpack.c.l.b16 %v28
    %v157 = vunpack.c.l.b16 %v29
    %v158 = vunpack.c.l.b16 %v30
    %v159 = vunpack.c.l.b16 %v31
    %v160 = vunpack.c.l.b16 %v32
    %v161 = vunpack.c.l.b16 %v33
    %v162 = vunpack.c.l.b16 %v34
    %v163 = vunpack.c.l.b16 %v35
    %v164 = vunpack.c.l.b16 %v36
    %v165 = vunpack.c.l.b16 %v37
    %v166 = vunpack.c.l.b16 %v38
    %v167 = vunpack.c.l.b16 %v39
    %v168 = vunpack.c.l.b16 %v40
    %v169 = vunpack.c.l.b16 %v41
    %v170 = vunpack.c.l.b16 %v42
    %v171 = vunpack.c.l.b16 %v43
    %v172 = vunpack.c.l.b16 %v44
    %v173 = vunpack.c.l.b16 %v45
    %v174 = vunpack.c.l.b16 %v46
    %v175 = vunpack.c.l.b16 %v47
    %v176 = vunpack.c.l.b16 %v48
    %v177 = vunpack.c.l.b16 %v49
    %v178 = vunpack.c.l.b16 %v50
    %v179 = vunpack.c.l.b16 %v51
    %v180 = vunpack.c.l.b16 %v52
    %v181 = vunpack.c.l.b16 %v53
    %v182 = vunpack.c.l.b16 %v54
    %v183 = vunpack.c.l.b16 %v55
    %v184 = vunpack.c.l.b16 %v56
    %v185 = vunpack.c.l.b16 %v57
    %v186 = vunpack.c.l.b16 %v58
    %v187 = vunpack.c.l.b16 %v59
    %v188 = vunpack.c.l.b16 %v60
    %v189 = vunpack.c.l.b16 %v61
    %v190 = vunpack.c.l.b16 %v62
    %v191 = vunpack.c.l.b16 %v63
    %v192 = vunpack.c.l.b16 %v64
    %v193 = vunpack.c.l.b16 %v65
    %v194 = vunpack.c.l.b16 %v66
    %v195 = vunpack.c.l.b16 %v67
    %v196 = vunpack.c.l.b16 %v68
    %v197 = vunpack.c.l.b16 %v69
    %v198 = vunpack.c.l.b16 %v70
    %v199 = vunpack.c.l.b16 %v71
    %v200 = vunpack.c.l.b16 %v72
    %v201 = vunpack.c.l.b16 %v73
    %v202 = vunpack.c.l.b16 %v74
    %v203 = vunpack.c.l.b16 %v75
    %v204 = vunpack.c.l.b16 %v76
    %v205 = vunpack.c.l.b16 %v77
    %v206 = vunpack.c.l.b16 %v78
    %v207 = vunpack.c.l.b16 %v79
    %v208 = vunpack.c.l.b16 %v80
    %v209 = vunpack.c.l.b16 %v81
    %v210 = vunpack.c.l.b16 %v82
    %v211 = vunpack.c.l.b16 %v83
    %v212 = vunpack.c.l.b16 %v84
    %v213 = vunpack.c.l.b16 %v85
    %v214 = vunpack.c.l.b16 %v86
    %v215 = vunpack.c.l.b16 %v87
    %v216 = vunpack.c.l.b16 %v88
    %v217 = vunpack.c.l.b16 %v89
    %v218 = vunpack.c.l.b16 %v90
    %v219 = vpack.c.b16 %v156, %v155
    %v220 = vpack.c.b16 %v158, %v157
    %v221 = vpack.c.b16 %v160, %v159
    %v222 = vpack.c.b16 %v162, %v161
    %v223 = vpack.c.b16 %v164, %v163
    %v224 = vpack.c.b16 %v166, %v165
    %v225 = vpack.c.b16 %v168, %v167
    %v226 = vpack.c.b16 %v170, %v169
    %v227 = vpack.c.b16 %v172, %v171
    %v228 = vpack.c.b16 %v174, %v173
    %v229 = vpack.c.b16 %v176, %v175
    %v230 = vpack.c.b16 %v178, %v177
    %v231 = vpack.c.b16 %v180, %v179
    %v232 = vpack.c.b16 %v182, %v181
    %v233 = vpack.c.b16 %v184, %v183
    %v234 = vpack.c.b16 %v186, %v185
    %v235 = vpack.c.b16 %v188, %v187
    %v236 = vpack.c.b16 %v190, %v189
    %v237 = vpack.c.b16 %v192, %v191
    %v238 = vpack.c.b16 %v194, %v193
    %v239 = vpack.c.b16 %v196, %v195
    %v240 = vpack.c.b16 %v198, %v197
    %v241 = vpack.c.b16 %v200, %v199
    %v242 = vpack.c.b16 %v202, %v201
    %v243 = vpack.c.b16 %v204, %v203
    %v244 = vpack.c.b16 %v206, %v205
    %v245 = vpack.c.b16 %v208, %v207
    %v246 = vpack.c.b16 %v210, %v209
    %v247 = vpack.c.b16 %v212, %v211
    %v248 = vpack.c.b16 %v214, %v213
    %v249 = vpack.c.b16 %v216, %v215
    %v250 = vpack.c.b16 %v218, %v217
    %v259 = vunpack.c.l.b16 %v19
    %v260 = vunpack.c.h.b16 %v19
    %v261 = vunpack.c.l.b16 %v20
    %v262 = vunpack.c.h.b16 %v20
    %v263 = vunpack.c.l.b16 %v21
    %v264 = vunpack.c.h.b16 %v21
    %v265 = vunpack.c.l.b16 %v22
    %v266 = vunpack.c.h.b16 %v22
    %v267 = vunpack.c.l.b16 %v23
    %v268 = vunpack.c.h.b16 %v23
    %v269 = vunpack.c.l.b16 %v24
    %v270 = vunpack.c.h.b16 %v24
    %v271 = vunpack.c.l.b16 %v25
    %v272 = vunpack.c.h.b16 %v25
    %v273 = vunpack.c.l.b16 %v26
    %v274 = vunpack.c.h.b16 %v26
    %v275 = vpack.c.b16 %v263, %v259
    %v276 = vpack.c.b16 %v264, %v260
    %v277 = vpack.c.b16 %v265, %v261
    %v278 = vpack.c.b16 %v266, %v262
    %v279 = vpack.c.b16 %v271, %v267
    %v280 = vpack.c.b16 %v272, %v268
    %v281 = vpack.c.b16 %v273, %v269
    %v282 = vpack.c.b16 %v274, %v270
    %vm291 = vcmask 261120
    %v293 = vsel %vm291, %v219, 0
    %v296 = vsel %vm291, %v220, 0
    %v299 = vsel %vm291, %v221, 0
    %v302 = vsel %vm291, %v222, 0
    %v305 = vsel %vm291, %v223, 0
    %v308 = vsel %vm291, %v224, 0
    %v311 = vsel %vm291, %v225, 0
    %v314 = vsel %vm291, %v226, 0
    %v317 = vsel %vm291, %v227, 0
    %v320 = vsel %vm291, %v228, 0
    %v323 = vsel %vm291, %v229, 0
    %v326 = vsel %vm291, %v230, 0
    %v329 = vsel %vm291, %v231, 0
    %v332 = vsel %vm291, %v232, 0
    %v335 = vsel %vm291, %v233, 0
    %v338 = vsel %vm291, %v234, 0
    %v341 = vsel %vm291, %v235, 0
    %v344 = vsel %vm291, %v236, 0
    %v347 = vsel %vm291, %v237, 0
    %v350 = vsel %vm291, %v238, 0
    %v353 = vsel %vm291, %v239, 0
    %v356 = vsel %vm291, %v240, 0
    %v359 = vsel %vm291, %v241, 0
    %v362 = vsel %vm291, %v242, 0
    %v365 = vsel %vm291, %v243, 0
    %v368 = vsel %vm291, %v244, 0
    %v371 = vsel %vm291, %v245, 0
    %v374 = vsel %vm291, %v246, 0
    %v377 = vsel %vm291, %v247, 0
    %v380 = vsel %vm291, %v248, 0
    %v383 = vsel %vm291, %v249, 0
    %v386 = vsel %vm291, %v250, 0
    %388 = vmatpush.bf16.msra.mxu0 0
    %389 = vmatpush.bf16.msra.mxu0 0
    %390 = vmatpush.bf16.msra.mxu0 0
    %391 = vmatpush.bf16.msra.mxu0 0
    %392 = vmatpush.bf16.msra.mxu0 0
    %393 = vmatpush.bf16.msra.mxu0 0
    %394 = vmatpush.bf16.msra.mxu0 %v279
    %395 = vmatpush.bf16.msra.mxu0 %v275
    %396 = vmatmul.bf16.gmra.mxu0 %v293
    %v397 = vpop.f32.mrf.mxu0
    %v398 = vadd.f32 0.0, %v397
    %v399 = vpop.f32.mrf.mxu0
    %v400 = vadd.f32 0.0, %v399
    %401 = vmatmul.bf16.gmra.mxu0 %v296
    %v402 = vpop.f32.mrf.mxu0
    %v403 = vadd.f32 0.0, %v402
    %v404 = vpop.f32.mrf.mxu0
    %v405 = vadd.f32 0.0, %v404
    %406 = vmatmul.bf16.gmra.mxu0 %v299
    %v407 = vpop.f32.mrf.mxu0
    %v408 = vadd.f32 0.0, %v407
    %v409 = vpop.f32.mrf.mxu0
    %v410 = vadd.f32 0.0, %v409
    %411 = vmatmul.bf16.gmra.mxu0 %v302
    %v412 = vpop.f32.mrf.mxu0
    %v413 = vadd.f32 0.0, %v412
    %v414 = vpop.f32.mrf.mxu0
    %v415 = vadd.f32 0.0, %v414
    %416 = vmatmul.bf16.gmra.mxu0 %v305
    %v417 = vpop.f32.mrf.mxu0
    %v418 = vadd.f32 0.0, %v417
    %v419 = vpop.f32.mrf.mxu0
    %v420 = vadd.f32 0.0, %v419
    %421 = vmatmul.bf16.gmra.mxu0 %v308
    %v422 = vpop.f32.mrf.mxu0
    %v423 = vadd.f32 0.0, %v422
    %v424 = vpop.f32.mrf.mxu0
    %v425 = vadd.f32 0.0, %v424
    %426 = vmatmul.bf16.gmra.mxu0 %v311
    %v427 = vpop.f32.mrf.mxu0
    %v428 = vadd.f32 0.0, %v427
    %v429 = vpop.f32.mrf.mxu0
    %v430 = vadd.f32 0.0, %v429
    %431 = vmatmul.bf16.gmra.mxu0 %v314
    %v432 = vpop.f32.mrf.mxu0
    %v433 = vadd.f32 0.0, %v432
    %v434 = vpop.f32.mrf.mxu0
    %v435 = vadd.f32 0.0, %v434
    %436 = vmatmul.bf16.gmra.mxu0 %v317
    %v437 = vpop.f32.mrf.mxu0
    %v438 = vadd.f32 0.0, %v437
    %v439 = vpop.f32.mrf.mxu0
    %v440 = vadd.f32 0.0, %v439
    %441 = vmatmul.bf16.gmra.mxu0 %v320
    %v442 = vpop.f32.mrf.mxu0
    %v443 = vadd.f32 0.0, %v442
    %v444 = vpop.f32.mrf.mxu0
    %v445 = vadd.f32 0.0, %v444
    %446 = vmatmul.bf16.gmra.mxu0 %v323
    %v447 = vpop.f32.mrf.mxu0
    %v448 = vadd.f32 0.0, %v447
    %v449 = vpop.f32.mrf.mxu0
    %v450 = vadd.f32 0.0, %v449
    %451 = vmatmul.bf16.gmra.mxu0 %v326
    %v452 = vpop.f32.mrf.mxu0
    %v453 = vadd.f32 0.0, %v452
    %v454 = vpop.f32.mrf.mxu0
    %v455 = vadd.f32 0.0, %v454
    %456 = vmatmul.bf16.gmra.mxu0 %v329
    %v457 = vpop.f32.mrf.mxu0
    %v458 = vadd.f32 0.0, %v457
    %v459 = vpop.f32.mrf.mxu0
    %v460 = vadd.f32 0.0, %v459
    %461 = vmatmul.bf16.gmra.mxu0 %v332
    %v462 = vpop.f32.mrf.mxu0
    %v463 = vadd.f32 0.0, %v462
    %v464 = vpop.f32.mrf.mxu0
    %v465 = vadd.f32 0.0, %v464
    %466 = vmatmul.bf16.gmra.mxu0 %v335
    %v467 = vpop.f32.mrf.mxu0
    %v468 = vadd.f32 0.0, %v467
    %v469 = vpop.f32.mrf.mxu0
    %v470 = vadd.f32 0.0, %v469
    %471 = vmatmul.bf16.gmra.mxu0 %v338
    %v472 = vpop.f32.mrf.mxu0
    %v473 = vadd.f32 0.0, %v472
    %v474 = vpop.f32.mrf.mxu0
    %v475 = vadd.f32 0.0, %v474
    %476 = vmatmul.bf16.gmra.mxu0 %v341
    %v477 = vpop.f32.mrf.mxu0
    %v478 = vadd.f32 0.0, %v477
    %v479 = vpop.f32.mrf.mxu0
    %v480 = vadd.f32 0.0, %v479
    %481 = vmatmul.bf16.gmra.mxu0 %v344
    %v482 = vpop.f32.mrf.mxu0
    %v483 = vadd.f32 0.0, %v482
    %v484 = vpop.f32.mrf.mxu0
    %v485 = vadd.f32 0.0, %v484
    %486 = vmatmul.bf16.gmra.mxu0 %v347
    %v487 = vpop.f32.mrf.mxu0
    %v488 = vadd.f32 0.0, %v487
    %v489 = vpop.f32.mrf.mxu0
    %v490 = vadd.f32 0.0, %v489
    %491 = vmatmul.bf16.gmra.mxu0 %v350
    %v492 = vpop.f32.mrf.mxu0
    %v493 = vadd.f32 0.0, %v492
    %v494 = vpop.f32.mrf.mxu0
    %v495 = vadd.f32 0.0, %v494
    %496 = vmatmul.bf16.gmra.mxu0 %v353
    %v497 = vpop.f32.mrf.mxu0
    %v498 = vadd.f32 0.0, %v497
    %v499 = vpop.f32.mrf.mxu0
    %v500 = vadd.f32 0.0, %v499
    %501 = vmatmul.bf16.gmra.mxu0 %v356
    %v502 = vpop.f32.mrf.mxu0
    %v503 = vadd.f32 0.0, %v502
    %v504 = vpop.f32.mrf.mxu0
    %v505 = vadd.f32 0.0, %v504
    %506 = vmatmul.bf16.gmra.mxu0 %v359
    %v507 = vpop.f32.mrf.mxu0
    %v508 = vadd.f32 0.0, %v507
    %v509 = vpop.f32.mrf.mxu0
    %v510 = vadd.f32 0.0, %v509
    %511 = vmatmul.bf16.gmra.mxu0 %v362
    %v512 = vpop.f32.mrf.mxu0
    %v513 = vadd.f32 0.0, %v512
    %v514 = vpop.f32.mrf.mxu0
    %v515 = vadd.f32 0.0, %v514
    %516 = vmatmul.bf16.gmra.mxu0 %v365
    %v517 = vpop.f32.mrf.mxu0
    %v518 = vadd.f32 0.0, %v517
    %v519 = vpop.f32.mrf.mxu0
    %v520 = vadd.f32 0.0, %v519
    %521 = vmatmul.bf16.gmra.mxu0 %v368
    %v522 = vpop.f32.mrf.mxu0
    %v523 = vadd.f32 0.0, %v522
    %v524 = vpop.f32.mrf.mxu0
    %v525 = vadd.f32 0.0, %v524
    %526 = vmatmul.bf16.gmra.mxu0 %v371
    %v527 = vpop.f32.mrf.mxu0
    %v528 = vadd.f32 0.0, %v527
    %v529 = vpop.f32.mrf.mxu0
    %v530 = vadd.f32 0.0, %v529
    %531 = vmatmul.bf16.gmra.mxu0 %v374
    %v532 = vpop.f32.mrf.mxu0
    %v533 = vadd.f32 0.0, %v532
    %v534 = vpop.f32.mrf.mxu0
    %v535 = vadd.f32 0.0, %v534
    %536 = vmatmul.bf16.gmra.mxu0 %v377
    %v537 = vpop.f32.mrf.mxu0
    %v538 = vadd.f32 0.0, %v537
    %v539 = vpop.f32.mrf.mxu0
    %v540 = vadd.f32 0.0, %v539
    %541 = vmatmul.bf16.gmra.mxu0 %v380
    %v542 = vpop.f32.mrf.mxu0
    %v543 = vadd.f32 0.0, %v542
    %v544 = vpop.f32.mrf.mxu0
    %v545 = vadd.f32 0.0, %v544
    %546 = vmatmul.bf16.gmra.mxu0 %v383
    %v547 = vpop.f32.mrf.mxu0
    %v548 = vadd.f32 0.0, %v547
    %v549 = vpop.f32.mrf.mxu0
    %v550 = vadd.f32 0.0, %v549
    %551 = vmatmul.bf16.gmra.mxu0 %v386
    %v552 = vpop.f32.mrf.mxu0
    %v553 = vadd.f32 0.0, %v552
    %v554 = vpop.f32.mrf.mxu0
    %v555 = vadd.f32 0.0, %v554
    %556 = vdwg.mxu0
    %557 = vmatpush.bf16.msra.mxu0 0
    %558 = vmatpush.bf16.msra.mxu0 0
    %559 = vmatpush.bf16.msra.mxu0 0
    %560 = vmatpush.bf16.msra.mxu0 0
    %561 = vmatpush.bf16.msra.mxu0 0
    %562 = vmatpush.bf16.msra.mxu0 0
    %563 = vmatpush.bf16.msra.mxu0 %v280
    %564 = vmatpush.bf16.msra.mxu0 %v276
    %565 = vmatmul.bf16.gmra.mxu0 %v293
    %v566 = vpop.f32.mrf.mxu0
    %v567 = vadd.f32 0.0, %v566
    %v568 = vpop.f32.mrf.mxu0
    %v569 = vadd.f32 0.0, %v568
    %570 = vmatmul.bf16.gmra.mxu0 %v296
    %v571 = vpop.f32.mrf.mxu0
    %v572 = vadd.f32 0.0, %v571
    %v573 = vpop.f32.mrf.mxu0
    %v574 = vadd.f32 0.0, %v573
    %575 = vmatmul.bf16.gmra.mxu0 %v299
    %v576 = vpop.f32.mrf.mxu0
    %v577 = vadd.f32 0.0, %v576
    %v578 = vpop.f32.mrf.mxu0
    %v579 = vadd.f32 0.0, %v578
    %580 = vmatmul.bf16.gmra.mxu0 %v302
    %v581 = vpop.f32.mrf.mxu0
    %v582 = vadd.f32 0.0, %v581
    %v583 = vpop.f32.mrf.mxu0
    %v584 = vadd.f32 0.0, %v583
    %585 = vmatmul.bf16.gmra.mxu0 %v305
    %v586 = vpop.f32.mrf.mxu0
    %v587 = vadd.f32 0.0, %v586
    %v588 = vpop.f32.mrf.mxu0
    %v589 = vadd.f32 0.0, %v588
    %590 = vmatmul.bf16.gmra.mxu0 %v308
    %v591 = vpop.f32.mrf.mxu0
    %v592 = vadd.f32 0.0, %v591
    %v593 = vpop.f32.mrf.mxu0
    %v594 = vadd.f32 0.0, %v593
    %595 = vmatmul.bf16.gmra.mxu0 %v311
    %v596 = vpop.f32.mrf.mxu0
    %v597 = vadd.f32 0.0, %v596
    %v598 = vpop.f32.mrf.mxu0
    %v599 = vadd.f32 0.0, %v598
    %600 = vmatmul.bf16.gmra.mxu0 %v314
    %v601 = vpop.f32.mrf.mxu0
    %v602 = vadd.f32 0.0, %v601
    %v603 = vpop.f32.mrf.mxu0
    %v604 = vadd.f32 0.0, %v603
    %605 = vmatmul.bf16.gmra.mxu0 %v317
    %v606 = vpop.f32.mrf.mxu0
    %v607 = vadd.f32 0.0, %v606
    %v608 = vpop.f32.mrf.mxu0
    %v609 = vadd.f32 0.0, %v608
    %610 = vmatmul.bf16.gmra.mxu0 %v320
    %v611 = vpop.f32.mrf.mxu0
    %v612 = vadd.f32 0.0, %v611
    %v613 = vpop.f32.mrf.mxu0
    %v614 = vadd.f32 0.0, %v613
    %615 = vmatmul.bf16.gmra.mxu0 %v323
    %v616 = vpop.f32.mrf.mxu0
    %v617 = vadd.f32 0.0, %v616
    %v618 = vpop.f32.mrf.mxu0
    %v619 = vadd.f32 0.0, %v618
    %620 = vmatmul.bf16.gmra.mxu0 %v326
    %v621 = vpop.f32.mrf.mxu0
    %v622 = vadd.f32 0.0, %v621
    %v623 = vpop.f32.mrf.mxu0
    %v624 = vadd.f32 0.0, %v623
    %625 = vmatmul.bf16.gmra.mxu0 %v329
    %v626 = vpop.f32.mrf.mxu0
    %v627 = vadd.f32 0.0, %v626
    %v628 = vpop.f32.mrf.mxu0
    %v629 = vadd.f32 0.0, %v628
    %630 = vmatmul.bf16.gmra.mxu0 %v332
    %v631 = vpop.f32.mrf.mxu0
    %v632 = vadd.f32 0.0, %v631
    %v633 = vpop.f32.mrf.mxu0
    %v634 = vadd.f32 0.0, %v633
    %635 = vmatmul.bf16.gmra.mxu0 %v335
    %v636 = vpop.f32.mrf.mxu0
    %v637 = vadd.f32 0.0, %v636
    %v638 = vpop.f32.mrf.mxu0
    %v639 = vadd.f32 0.0, %v638
    %640 = vmatmul.bf16.gmra.mxu0 %v338
    %v641 = vpop.f32.mrf.mxu0
    %v642 = vadd.f32 0.0, %v641
    %v643 = vpop.f32.mrf.mxu0
    %v644 = vadd.f32 0.0, %v643
    %645 = vmatmul.bf16.gmra.mxu0 %v341
    %v646 = vpop.f32.mrf.mxu0
    %v647 = vadd.f32 0.0, %v646
    %v648 = vpop.f32.mrf.mxu0
    %v649 = vadd.f32 0.0, %v648
    %650 = vmatmul.bf16.gmra.mxu0 %v344
    %v651 = vpop.f32.mrf.mxu0
    %v652 = vadd.f32 0.0, %v651
    %v653 = vpop.f32.mrf.mxu0
    %v654 = vadd.f32 0.0, %v653
    %655 = vmatmul.bf16.gmra.mxu0 %v347
    %v656 = vpop.f32.mrf.mxu0
    %v657 = vadd.f32 0.0, %v656
    %v658 = vpop.f32.mrf.mxu0
    %v659 = vadd.f32 0.0, %v658
    %660 = vmatmul.bf16.gmra.mxu0 %v350
    %v661 = vpop.f32.mrf.mxu0
    %v662 = vadd.f32 0.0, %v661
    %v663 = vpop.f32.mrf.mxu0
    %v664 = vadd.f32 0.0, %v663
    %665 = vmatmul.bf16.gmra.mxu0 %v353
    %v666 = vpop.f32.mrf.mxu0
    %v667 = vadd.f32 0.0, %v666
    %v668 = vpop.f32.mrf.mxu0
    %v669 = vadd.f32 0.0, %v668
    %670 = vmatmul.bf16.gmra.mxu0 %v356
    %v671 = vpop.f32.mrf.mxu0
    %v672 = vadd.f32 0.0, %v671
    %v673 = vpop.f32.mrf.mxu0
    %v674 = vadd.f32 0.0, %v673
    %675 = vmatmul.bf16.gmra.mxu0 %v359
    %v676 = vpop.f32.mrf.mxu0
    %v677 = vadd.f32 0.0, %v676
    %v678 = vpop.f32.mrf.mxu0
    %v679 = vadd.f32 0.0, %v678
    %680 = vmatmul.bf16.gmra.mxu0 %v362
    %v681 = vpop.f32.mrf.mxu0
    %v682 = vadd.f32 0.0, %v681
    %v683 = vpop.f32.mrf.mxu0
    %v684 = vadd.f32 0.0, %v683
    %685 = vmatmul.bf16.gmra.mxu0 %v365
    %v686 = vpop.f32.mrf.mxu0
    %v687 = vadd.f32 0.0, %v686
    %v688 = vpop.f32.mrf.mxu0
    %v689 = vadd.f32 0.0, %v688
    %690 = vmatmul.bf16.gmra.mxu0 %v368
    %v691 = vpop.f32.mrf.mxu0
    %v692 = vadd.f32 0.0, %v691
    %v693 = vpop.f32.mrf.mxu0
    %v694 = vadd.f32 0.0, %v693
    %695 = vmatmul.bf16.gmra.mxu0 %v371
    %v696 = vpop.f32.mrf.mxu0
    %v697 = vadd.f32 0.0, %v696
    %v698 = vpop.f32.mrf.mxu0
    %v699 = vadd.f32 0.0, %v698
    %700 = vmatmul.bf16.gmra.mxu0 %v374
    %v701 = vpop.f32.mrf.mxu0
    %v702 = vadd.f32 0.0, %v701
    %v703 = vpop.f32.mrf.mxu0
    %v704 = vadd.f32 0.0, %v703
    %705 = vmatmul.bf16.gmra.mxu0 %v377
    %v706 = vpop.f32.mrf.mxu0
    %v707 = vadd.f32 0.0, %v706
    %v708 = vpop.f32.mrf.mxu0
    %v709 = vadd.f32 0.0, %v708
    %710 = vmatmul.bf16.gmra.mxu0 %v380
    %v711 = vpop.f32.mrf.mxu0
    %v712 = vadd.f32 0.0, %v711
    %v713 = vpop.f32.mrf.mxu0
    %v714 = vadd.f32 0.0, %v713
    %715 = vmatmul.bf16.gmra.mxu0 %v383
    %v716 = vpop.f32.mrf.mxu0
    %v717 = vadd.f32 0.0, %v716
    %v718 = vpop.f32.mrf.mxu0
    %v719 = vadd.f32 0.0, %v718
    %720 = vmatmul.bf16.gmra.mxu0 %v386
    %v721 = vpop.f32.mrf.mxu0
    %v722 = vadd.f32 0.0, %v721
    %v723 = vpop.f32.mrf.mxu0
    %v724 = vadd.f32 0.0, %v723
    %725 = vdwg.mxu0
    %726 = vmatpush.bf16.msra.mxu0 0
    %727 = vmatpush.bf16.msra.mxu0 0
    %728 = vmatpush.bf16.msra.mxu0 0
    %729 = vmatpush.bf16.msra.mxu0 0
    %730 = vmatpush.bf16.msra.mxu0 0
    %731 = vmatpush.bf16.msra.mxu0 0
    %732 = vmatpush.bf16.msra.mxu0 %v281
    %733 = vmatpush.bf16.msra.mxu0 %v277
    %734 = vmatmul.bf16.gmra.mxu0 %v293
    %v735 = vpop.f32.mrf.mxu0
    %v736 = vadd.f32 0.0, %v735
    %v737 = vpop.f32.mrf.mxu0
    %v738 = vadd.f32 0.0, %v737
    %739 = vmatmul.bf16.gmra.mxu0 %v296
    %v740 = vpop.f32.mrf.mxu0
    %v741 = vadd.f32 0.0, %v740
    %v742 = vpop.f32.mrf.mxu0
    %v743 = vadd.f32 0.0, %v742
    %744 = vmatmul.bf16.gmra.mxu0 %v299
    %v745 = vpop.f32.mrf.mxu0
    %v746 = vadd.f32 0.0, %v745
    %v747 = vpop.f32.mrf.mxu0
    %v748 = vadd.f32 0.0, %v747
    %749 = vmatmul.bf16.gmra.mxu0 %v302
    %v750 = vpop.f32.mrf.mxu0
    %v751 = vadd.f32 0.0, %v750
    %v752 = vpop.f32.mrf.mxu0
    %v753 = vadd.f32 0.0, %v752
    %754 = vmatmul.bf16.gmra.mxu0 %v305
    %v755 = vpop.f32.mrf.mxu0
    %v756 = vadd.f32 0.0, %v755
    %v757 = vpop.f32.mrf.mxu0
    %v758 = vadd.f32 0.0, %v757
    %759 = vmatmul.bf16.gmra.mxu0 %v308
    %v760 = vpop.f32.mrf.mxu0
    %v761 = vadd.f32 0.0, %v760
    %v762 = vpop.f32.mrf.mxu0
    %v763 = vadd.f32 0.0, %v762
    %764 = vmatmul.bf16.gmra.mxu0 %v311
    %v765 = vpop.f32.mrf.mxu0
    %v766 = vadd.f32 0.0, %v765
    %v767 = vpop.f32.mrf.mxu0
    %v768 = vadd.f32 0.0, %v767
    %769 = vmatmul.bf16.gmra.mxu0 %v314
    %v770 = vpop.f32.mrf.mxu0
    %v771 = vadd.f32 0.0, %v770
    %v772 = vpop.f32.mrf.mxu0
    %v773 = vadd.f32 0.0, %v772
    %774 = vmatmul.bf16.gmra.mxu0 %v317
    %v775 = vpop.f32.mrf.mxu0
    %v776 = vadd.f32 0.0, %v775
    %v777 = vpop.f32.mrf.mxu0
    %v778 = vadd.f32 0.0, %v777
    %779 = vmatmul.bf16.gmra.mxu0 %v320
    %v780 = vpop.f32.mrf.mxu0
    %v781 = vadd.f32 0.0, %v780
    %v782 = vpop.f32.mrf.mxu0
    %v783 = vadd.f32 0.0, %v782
    %784 = vmatmul.bf16.gmra.mxu0 %v323
    %v785 = vpop.f32.mrf.mxu0
    %v786 = vadd.f32 0.0, %v785
    %v787 = vpop.f32.mrf.mxu0
    %v788 = vadd.f32 0.0, %v787
    %789 = vmatmul.bf16.gmra.mxu0 %v326
    %v790 = vpop.f32.mrf.mxu0
    %v791 = vadd.f32 0.0, %v790
    %v792 = vpop.f32.mrf.mxu0
    %v793 = vadd.f32 0.0, %v792
    %794 = vmatmul.bf16.gmra.mxu0 %v329
    %v795 = vpop.f32.mrf.mxu0
    %v796 = vadd.f32 0.0, %v795
    %v797 = vpop.f32.mrf.mxu0
    %v798 = vadd.f32 0.0, %v797
    %799 = vmatmul.bf16.gmra.mxu0 %v332
    %v800 = vpop.f32.mrf.mxu0
    %v801 = vadd.f32 0.0, %v800
    %v802 = vpop.f32.mrf.mxu0
    %v803 = vadd.f32 0.0, %v802
    %804 = vmatmul.bf16.gmra.mxu0 %v335
    %v805 = vpop.f32.mrf.mxu0
    %v806 = vadd.f32 0.0, %v805
    %v807 = vpop.f32.mrf.mxu0
    %v808 = vadd.f32 0.0, %v807
    %809 = vmatmul.bf16.gmra.mxu0 %v338
    %v810 = vpop.f32.mrf.mxu0
    %v811 = vadd.f32 0.0, %v810
    %v812 = vpop.f32.mrf.mxu0
    %v813 = vadd.f32 0.0, %v812
    %814 = vmatmul.bf16.gmra.mxu0 %v341
    %v815 = vpop.f32.mrf.mxu0
    %v816 = vadd.f32 0.0, %v815
    %v817 = vpop.f32.mrf.mxu0
    %v818 = vadd.f32 0.0, %v817
    %819 = vmatmul.bf16.gmra.mxu0 %v344
    %v820 = vpop.f32.mrf.mxu0
    %v821 = vadd.f32 0.0, %v820
    %v822 = vpop.f32.mrf.mxu0
    %v823 = vadd.f32 0.0, %v822
    %824 = vmatmul.bf16.gmra.mxu0 %v347
    %v825 = vpop.f32.mrf.mxu0
    %v826 = vadd.f32 0.0, %v825
    %v827 = vpop.f32.mrf.mxu0
    %v828 = vadd.f32 0.0, %v827
    %829 = vmatmul.bf16.gmra.mxu0 %v350
    %v830 = vpop.f32.mrf.mxu0
    %v831 = vadd.f32 0.0, %v830
    %v832 = vpop.f32.mrf.mxu0
    %v833 = vadd.f32 0.0, %v832
    %834 = vmatmul.bf16.gmra.mxu0 %v353
    %v835 = vpop.f32.mrf.mxu0
    %v836 = vadd.f32 0.0, %v835
    %v837 = vpop.f32.mrf.mxu0
    %v838 = vadd.f32 0.0, %v837
    %839 = vmatmul.bf16.gmra.mxu0 %v356
    %v840 = vpop.f32.mrf.mxu0
    %v841 = vadd.f32 0.0, %v840
    %v842 = vpop.f32.mrf.mxu0
    %v843 = vadd.f32 0.0, %v842
    %844 = vmatmul.bf16.gmra.mxu0 %v359
    %v845 = vpop.f32.mrf.mxu0
    %v846 = vadd.f32 0.0, %v845
    %v847 = vpop.f32.mrf.mxu0
    %v848 = vadd.f32 0.0, %v847
    %849 = vmatmul.bf16.gmra.mxu0 %v362
    %v850 = vpop.f32.mrf.mxu0
    %v851 = vadd.f32 0.0, %v850
    %v852 = vpop.f32.mrf.mxu0
    %v853 = vadd.f32 0.0, %v852
    %854 = vmatmul.bf16.gmra.mxu0 %v365
    %v855 = vpop.f32.mrf.mxu0
    %v856 = vadd.f32 0.0, %v855
    %v857 = vpop.f32.mrf.mxu0
    %v858 = vadd.f32 0.0, %v857
    %859 = vmatmul.bf16.gmra.mxu0 %v368
    %v860 = vpop.f32.mrf.mxu0
    %v861 = vadd.f32 0.0, %v860
    %v862 = vpop.f32.mrf.mxu0
    %v863 = vadd.f32 0.0, %v862
    %864 = vmatmul.bf16.gmra.mxu0 %v371
    %v865 = vpop.f32.mrf.mxu0
    %v866 = vadd.f32 0.0, %v865
    %v867 = vpop.f32.mrf.mxu0
    %v868 = vadd.f32 0.0, %v867
    %869 = vmatmul.bf16.gmra.mxu0 %v374
    %v870 = vpop.f32.mrf.mxu0
    %v871 = vadd.f32 0.0, %v870
    %v872 = vpop.f32.mrf.mxu0
    %v873 = vadd.f32 0.0, %v872
    %874 = vmatmul.bf16.gmra.mxu0 %v377
    %v875 = vpop.f32.mrf.mxu0
    %v876 = vadd.f32 0.0, %v875
    %v877 = vpop.f32.mrf.mxu0
    %v878 = vadd.f32 0.0, %v877
    %879 = vmatmul.bf16.gmra.mxu0 %v380
    %v880 = vpop.f32.mrf.mxu0
    %v881 = vadd.f32 0.0, %v880
    %v882 = vpop.f32.mrf.mxu0
    %v883 = vadd.f32 0.0, %v882
    %884 = vmatmul.bf16.gmra.mxu0 %v383
    %v885 = vpop.f32.mrf.mxu0
    %v886 = vadd.f32 0.0, %v885
    %v887 = vpop.f32.mrf.mxu0
    %v888 = vadd.f32 0.0, %v887
    %889 = vmatmul.bf16.gmra.mxu0 %v386
    %v890 = vpop.f32.mrf.mxu0
    %v891 = vadd.f32 0.0, %v890
    %v892 = vpop.f32.mrf.mxu0
    %v893 = vadd.f32 0.0, %v892
    %894 = vdwg.mxu0
    %895 = vmatpush.bf16.msra.mxu0 0
    %896 = vmatpush.bf16.msra.mxu0 0
    %897 = vmatpush.bf16.msra.mxu0 0
    %898 = vmatpush.bf16.msra.mxu0 0
    %899 = vmatpush.bf16.msra.mxu0 0
    %900 = vmatpush.bf16.msra.mxu0 0
    %901 = vmatpush.bf16.msra.mxu0 %v282
    %902 = vmatpush.bf16.msra.mxu0 %v278
    %903 = vmatmul.bf16.gmra.mxu0 %v293
    %v904 = vpop.f32.mrf.mxu0
    %v905 = vadd.f32 0.0, %v904
    %v906 = vpop.f32.mrf.mxu0
    %v907 = vadd.f32 0.0, %v906
    %908 = vmatmul.bf16.gmra.mxu0 %v296
    %v909 = vpop.f32.mrf.mxu0
    %v910 = vadd.f32 0.0, %v909
    %v911 = vpop.f32.mrf.mxu0
    %v912 = vadd.f32 0.0, %v911
    %913 = vmatmul.bf16.gmra.mxu0 %v299
    %v914 = vpop.f32.mrf.mxu0
    %v915 = vadd.f32 0.0, %v914
    %v916 = vpop.f32.mrf.mxu0
    %v917 = vadd.f32 0.0, %v916
    %918 = vmatmul.bf16.gmra.mxu0 %v302
    %v919 = vpop.f32.mrf.mxu0
    %v920 = vadd.f32 0.0, %v919
    %v921 = vpop.f32.mrf.mxu0
    %v922 = vadd.f32 0.0, %v921
    %923 = vmatmul.bf16.gmra.mxu0 %v305
    %v924 = vpop.f32.mrf.mxu0
    %v925 = vadd.f32 0.0, %v924
    %v926 = vpop.f32.mrf.mxu0
    %v927 = vadd.f32 0.0, %v926
    %928 = vmatmul.bf16.gmra.mxu0 %v308
    %v929 = vpop.f32.mrf.mxu0
    %v930 = vadd.f32 0.0, %v929
    %v931 = vpop.f32.mrf.mxu0
    %v932 = vadd.f32 0.0, %v931
    %933 = vmatmul.bf16.gmra.mxu0 %v311
    %v934 = vpop.f32.mrf.mxu0
    %v935 = vadd.f32 0.0, %v934
    %v936 = vpop.f32.mrf.mxu0
    %v937 = vadd.f32 0.0, %v936
    %938 = vmatmul.bf16.gmra.mxu0 %v314
    %v939 = vpop.f32.mrf.mxu0
    %v940 = vadd.f32 0.0, %v939
    %v941 = vpop.f32.mrf.mxu0
    %v942 = vadd.f32 0.0, %v941
    %943 = vmatmul.bf16.gmra.mxu0 %v317
    %v944 = vpop.f32.mrf.mxu0
    %v945 = vadd.f32 0.0, %v944
    %v946 = vpop.f32.mrf.mxu0
    %v947 = vadd.f32 0.0, %v946
    %948 = vmatmul.bf16.gmra.mxu0 %v320
    %v949 = vpop.f32.mrf.mxu0
    %v950 = vadd.f32 0.0, %v949
    %v951 = vpop.f32.mrf.mxu0
    %v952 = vadd.f32 0.0, %v951
    %953 = vmatmul.bf16.gmra.mxu0 %v323
    %v954 = vpop.f32.mrf.mxu0
    %v955 = vadd.f32 0.0, %v954
    %v956 = vpop.f32.mrf.mxu0
    %v957 = vadd.f32 0.0, %v956
    %958 = vmatmul.bf16.gmra.mxu0 %v326
    %v959 = vpop.f32.mrf.mxu0
    %v960 = vadd.f32 0.0, %v959
    %v961 = vpop.f32.mrf.mxu0
    %v962 = vadd.f32 0.0, %v961
    %963 = vmatmul.bf16.gmra.mxu0 %v329
    %v964 = vpop.f32.mrf.mxu0
    %v965 = vadd.f32 0.0, %v964
    %v966 = vpop.f32.mrf.mxu0
    %v967 = vadd.f32 0.0, %v966
    %968 = vmatmul.bf16.gmra.mxu0 %v332
    %v969 = vpop.f32.mrf.mxu0
    %v970 = vadd.f32 0.0, %v969
    %v971 = vpop.f32.mrf.mxu0
    %v972 = vadd.f32 0.0, %v971
    %973 = vmatmul.bf16.gmra.mxu0 %v335
    %v974 = vpop.f32.mrf.mxu0
    %v975 = vadd.f32 0.0, %v974
    %v976 = vpop.f32.mrf.mxu0
    %v977 = vadd.f32 0.0, %v976
    %978 = vmatmul.bf16.gmra.mxu0 %v338
    %v979 = vpop.f32.mrf.mxu0
    %v980 = vadd.f32 0.0, %v979
    %v981 = vpop.f32.mrf.mxu0
    %v982 = vadd.f32 0.0, %v981
    %983 = vmatmul.bf16.gmra.mxu0 %v341
    %v984 = vpop.f32.mrf.mxu0
    %v985 = vadd.f32 0.0, %v984
    %v986 = vpop.f32.mrf.mxu0
    %v987 = vadd.f32 0.0, %v986
    %988 = vmatmul.bf16.gmra.mxu0 %v344
    %v989 = vpop.f32.mrf.mxu0
    %v990 = vadd.f32 0.0, %v989
    %v991 = vpop.f32.mrf.mxu0
    %v992 = vadd.f32 0.0, %v991
    %993 = vmatmul.bf16.gmra.mxu0 %v347
    %v994 = vpop.f32.mrf.mxu0
    %v995 = vadd.f32 0.0, %v994
    %v996 = vpop.f32.mrf.mxu0
    %v997 = vadd.f32 0.0, %v996
    %998 = vmatmul.bf16.gmra.mxu0 %v350
    %v999 = vpop.f32.mrf.mxu0
    %v1000 = vadd.f32 0.0, %v999
    %v1001 = vpop.f32.mrf.mxu0
    %v1002 = vadd.f32 0.0, %v1001
    %1003 = vmatmul.bf16.gmra.mxu0 %v353
    %v1004 = vpop.f32.mrf.mxu0
    %v1005 = vadd.f32 0.0, %v1004
    %v1006 = vpop.f32.mrf.mxu0
    %v1007 = vadd.f32 0.0, %v1006
    %1008 = vmatmul.bf16.gmra.mxu0 %v356
    %v1009 = vpop.f32.mrf.mxu0
    %v1010 = vadd.f32 0.0, %v1009
    %v1011 = vpop.f32.mrf.mxu0
    %v1012 = vadd.f32 0.0, %v1011
    %1013 = vmatmul.bf16.gmra.mxu0 %v359
    %v1014 = vpop.f32.mrf.mxu0
    %v1015 = vadd.f32 0.0, %v1014
    %v1016 = vpop.f32.mrf.mxu0
    %v1017 = vadd.f32 0.0, %v1016
    %1018 = vmatmul.bf16.gmra.mxu0 %v362
    %v1019 = vpop.f32.mrf.mxu0
    %v1020 = vadd.f32 0.0, %v1019
    %v1021 = vpop.f32.mrf.mxu0
    %v1022 = vadd.f32 0.0, %v1021
    %1023 = vmatmul.bf16.gmra.mxu0 %v365
    %v1024 = vpop.f32.mrf.mxu0
    %v1025 = vadd.f32 0.0, %v1024
    %v1026 = vpop.f32.mrf.mxu0
    %v1027 = vadd.f32 0.0, %v1026
    %1028 = vmatmul.bf16.gmra.mxu0 %v368
    %v1029 = vpop.f32.mrf.mxu0
    %v1030 = vadd.f32 0.0, %v1029
    %v1031 = vpop.f32.mrf.mxu0
    %v1032 = vadd.f32 0.0, %v1031
    %1033 = vmatmul.bf16.gmra.mxu0 %v371
    %v1034 = vpop.f32.mrf.mxu0
    %v1035 = vadd.f32 0.0, %v1034
    %v1036 = vpop.f32.mrf.mxu0
    %v1037 = vadd.f32 0.0, %v1036
    %1038 = vmatmul.bf16.gmra.mxu0 %v374
    %v1039 = vpop.f32.mrf.mxu0
    %v1040 = vadd.f32 0.0, %v1039
    %v1041 = vpop.f32.mrf.mxu0
    %v1042 = vadd.f32 0.0, %v1041
    %1043 = vmatmul.bf16.gmra.mxu0 %v377
    %v1044 = vpop.f32.mrf.mxu0
    %v1045 = vadd.f32 0.0, %v1044
    %v1046 = vpop.f32.mrf.mxu0
    %v1047 = vadd.f32 0.0, %v1046
    %1048 = vmatmul.bf16.gmra.mxu0 %v380
    %v1049 = vpop.f32.mrf.mxu0
    %v1050 = vadd.f32 0.0, %v1049
    %v1051 = vpop.f32.mrf.mxu0
    %v1052 = vadd.f32 0.0, %v1051
    %1053 = vmatmul.bf16.gmra.mxu0 %v383
    %v1054 = vpop.f32.mrf.mxu0
    %v1055 = vadd.f32 0.0, %v1054
    %v1056 = vpop.f32.mrf.mxu0
    %v1057 = vadd.f32 0.0, %v1056
    %1058 = vmatmul.bf16.gmra.mxu0 %v386
    %v1059 = vpop.f32.mrf.mxu0
    %v1060 = vadd.f32 0.0, %v1059
    %v1061 = vpop.f32.mrf.mxu0
    %v1062 = vadd.f32 0.0, %v1061
    %1063 = vdwg.mxu0
    %v1064 = vmax.f32 %v398, 0.0
    %v1065 = vmax.f32 %v567, 0.0
    %v1066 = vmax.f32 %v736, 0.0
    %v1067 = vmax.f32 %v905, 0.0
    %v1068 = vmax.f32 %v400, 0.0
    %v1069 = vmax.f32 %v569, 0.0
    %v1070 = vmax.f32 %v738, 0.0
    %v1071 = vmax.f32 %v907, 0.0
    %v1072 = vmax.f32 %v403, 0.0
    %v1073 = vmax.f32 %v572, 0.0
    %v1074 = vmax.f32 %v741, 0.0
    %v1075 = vmax.f32 %v910, 0.0
    %v1076 = vmax.f32 %v405, 0.0
    %v1077 = vmax.f32 %v574, 0.0
    %v1078 = vmax.f32 %v743, 0.0
    %v1079 = vmax.f32 %v912, 0.0
    %v1080 = vmax.f32 %v408, 0.0
    %v1081 = vmax.f32 %v577, 0.0
    %v1082 = vmax.f32 %v746, 0.0
    %v1083 = vmax.f32 %v915, 0.0
    %v1084 = vmax.f32 %v410, 0.0
    %v1085 = vmax.f32 %v579, 0.0
    %v1086 = vmax.f32 %v748, 0.0
    %v1087 = vmax.f32 %v917, 0.0
    %v1088 = vmax.f32 %v413, 0.0
    %v1089 = vmax.f32 %v582, 0.0
    %v1090 = vmax.f32 %v751, 0.0
    %v1091 = vmax.f32 %v920, 0.0
    %v1092 = vmax.f32 %v415, 0.0
    %v1093 = vmax.f32 %v584, 0.0
    %v1094 = vmax.f32 %v753, 0.0
    %v1095 = vmax.f32 %v922, 0.0
    %v1096 = vmax.f32 %v418, 0.0
    %v1097 = vmax.f32 %v587, 0.0
    %v1098 = vmax.f32 %v756, 0.0
    %v1099 = vmax.f32 %v925, 0.0
    %v1100 = vmax.f32 %v420, 0.0
    %v1101 = vmax.f32 %v589, 0.0
    %v1102 = vmax.f32 %v758, 0.0
    %v1103 = vmax.f32 %v927, 0.0
    %v1104 = vmax.f32 %v423, 0.0
    %v1105 = vmax.f32 %v592, 0.0
    %v1106 = vmax.f32 %v761, 0.0
    %v1107 = vmax.f32 %v930, 0.0
    %v1108 = vmax.f32 %v425, 0.0
    %v1109 = vmax.f32 %v594, 0.0
    %v1110 = vmax.f32 %v763, 0.0
    %v1111 = vmax.f32 %v932, 0.0
    %v1112 = vmax.f32 %v428, 0.0
    %v1113 = vmax.f32 %v597, 0.0
    %v1114 = vmax.f32 %v766, 0.0
    %v1115 = vmax.f32 %v935, 0.0
    %v1116 = vmax.f32 %v430, 0.0
    %v1117 = vmax.f32 %v599, 0.0
    %v1118 = vmax.f32 %v768, 0.0
    %v1119 = vmax.f32 %v937, 0.0
    %v1120 = vmax.f32 %v433, 0.0
    %v1121 = vmax.f32 %v602, 0.0
    %v1122 = vmax.f32 %v771, 0.0
    %v1123 = vmax.f32 %v940, 0.0
    %v1124 = vmax.f32 %v435, 0.0
    %v1125 = vmax.f32 %v604, 0.0
    %v1126 = vmax.f32 %v773, 0.0
    %v1127 = vmax.f32 %v942, 0.0
    %v1128 = vmax.f32 %v438, 0.0
    %v1129 = vmax.f32 %v607, 0.0
    %v1130 = vmax.f32 %v776, 0.0
    %v1131 = vmax.f32 %v945, 0.0
    %v1132 = vmax.f32 %v440, 0.0
    %v1133 = vmax.f32 %v609, 0.0
    %v1134 = vmax.f32 %v778, 0.0
    %v1135 = vmax.f32 %v947, 0.0
    %v1136 = vmax.f32 %v443, 0.0
    %v1137 = vmax.f32 %v612, 0.0
    %v1138 = vmax.f32 %v781, 0.0
    %v1139 = vmax.f32 %v950, 0.0
    %v1140 = vmax.f32 %v445, 0.0
    %v1141 = vmax.f32 %v614, 0.0
    %v1142 = vmax.f32 %v783, 0.0
    %v1143 = vmax.f32 %v952, 0.0
    %v1144 = vmax.f32 %v448, 0.0
    %v1145 = vmax.f32 %v617, 0.0
    %v1146 = vmax.f32 %v786, 0.0
    %v1147 = vmax.f32 %v955, 0.0
    %v1148 = vmax.f32 %v450, 0.0
    %v1149 = vmax.f32 %v619, 0.0
    %v1150 = vmax.f32 %v788, 0.0
    %v1151 = vmax.f32 %v957, 0.0
    %v1152 = vmax.f32 %v453, 0.0
    %v1153 = vmax.f32 %v622, 0.0
    %v1154 = vmax.f32 %v791, 0.0
    %v1155 = vmax.f32 %v960, 0.0
    %v1156 = vmax.f32 %v455, 0.0
    %v1157 = vmax.f32 %v624, 0.0
    %v1158 = vmax.f32 %v793, 0.0
    %v1159 = vmax.f32 %v962, 0.0
    %v1160 = vmax.f32 %v458, 0.0
    %v1161 = vmax.f32 %v627, 0.0
    %v1162 = vmax.f32 %v796, 0.0
    %v1163 = vmax.f32 %v965, 0.0
    %v1164 = vmax.f32 %v460, 0.0
    %v1165 = vmax.f32 %v629, 0.0
    %v1166 = vmax.f32 %v798, 0.0
    %v1167 = vmax.f32 %v967, 0.0
    %v1168 = vmax.f32 %v463, 0.0
    %v1169 = vmax.f32 %v632, 0.0
    %v1170 = vmax.f32 %v801, 0.0
    %v1171 = vmax.f32 %v970, 0.0
    %v1172 = vmax.f32 %v465, 0.0
    %v1173 = vmax.f32 %v634, 0.0
    %v1174 = vmax.f32 %v803, 0.0
    %v1175 = vmax.f32 %v972, 0.0
    %v1176 = vmax.f32 %v468, 0.0
    %v1177 = vmax.f32 %v637, 0.0
    %v1178 = vmax.f32 %v806, 0.0
    %v1179 = vmax.f32 %v975, 0.0
    %v1180 = vmax.f32 %v470, 0.0
    %v1181 = vmax.f32 %v639, 0.0
    %v1182 = vmax.f32 %v808, 0.0
    %v1183 = vmax.f32 %v977, 0.0
    %v1184 = vmax.f32 %v473, 0.0
    %v1185 = vmax.f32 %v642, 0.0
    %v1186 = vmax.f32 %v811, 0.0
    %v1187 = vmax.f32 %v980, 0.0
    %v1188 = vmax.f32 %v475, 0.0
    %v1189 = vmax.f32 %v644, 0.0
    %v1190 = vmax.f32 %v813, 0.0
    %v1191 = vmax.f32 %v982, 0.0
    %v1192 = vmax.f32 %v478, 0.0
    %v1193 = vmax.f32 %v647, 0.0
    %v1194 = vmax.f32 %v816, 0.0
    %v1195 = vmax.f32 %v985, 0.0
    %v1196 = vmax.f32 %v480, 0.0
    %v1197 = vmax.f32 %v649, 0.0
    %v1198 = vmax.f32 %v818, 0.0
    %v1199 = vmax.f32 %v987, 0.0
    %v1200 = vmax.f32 %v483, 0.0
    %v1201 = vmax.f32 %v652, 0.0
    %v1202 = vmax.f32 %v821, 0.0
    %v1203 = vmax.f32 %v990, 0.0
    %v1204 = vmax.f32 %v485, 0.0
    %v1205 = vmax.f32 %v654, 0.0
    %v1206 = vmax.f32 %v823, 0.0
    %v1207 = vmax.f32 %v992, 0.0
    %v1208 = vmax.f32 %v488, 0.0
    %v1209 = vmax.f32 %v657, 0.0
    %v1210 = vmax.f32 %v826, 0.0
    %v1211 = vmax.f32 %v995, 0.0
    %v1212 = vmax.f32 %v490, 0.0
    %v1213 = vmax.f32 %v659, 0.0
    %v1214 = vmax.f32 %v828, 0.0
    %v1215 = vmax.f32 %v997, 0.0
    %v1216 = vmax.f32 %v493, 0.0
    %v1217 = vmax.f32 %v662, 0.0
    %v1218 = vmax.f32 %v831, 0.0
    %v1219 = vmax.f32 %v1000, 0.0
    %v1220 = vmax.f32 %v495, 0.0
    %v1221 = vmax.f32 %v664, 0.0
    %v1222 = vmax.f32 %v833, 0.0
    %v1223 = vmax.f32 %v1002, 0.0
    %v1224 = vmax.f32 %v498, 0.0
    %v1225 = vmax.f32 %v667, 0.0
    %v1226 = vmax.f32 %v836, 0.0
    %v1227 = vmax.f32 %v1005, 0.0
    %v1228 = vmax.f32 %v500, 0.0
    %v1229 = vmax.f32 %v669, 0.0
    %v1230 = vmax.f32 %v838, 0.0
    %v1231 = vmax.f32 %v1007, 0.0
    %v1232 = vmax.f32 %v503, 0.0
    %v1233 = vmax.f32 %v672, 0.0
    %v1234 = vmax.f32 %v841, 0.0
    %v1235 = vmax.f32 %v1010, 0.0
    %v1236 = vmax.f32 %v505, 0.0
    %v1237 = vmax.f32 %v674, 0.0
    %v1238 = vmax.f32 %v843, 0.0
    %v1239 = vmax.f32 %v1012, 0.0
    %v1240 = vmax.f32 %v508, 0.0
    %v1241 = vmax.f32 %v677, 0.0
    %v1242 = vmax.f32 %v846, 0.0
    %v1243 = vmax.f32 %v1015, 0.0
    %v1244 = vmax.f32 %v510, 0.0
    %v1245 = vmax.f32 %v679, 0.0
    %v1246 = vmax.f32 %v848, 0.0
    %v1247 = vmax.f32 %v1017, 0.0
    %v1248 = vmax.f32 %v513, 0.0
    %v1249 = vmax.f32 %v682, 0.0
    %v1250 = vmax.f32 %v851, 0.0
    %v1251 = vmax.f32 %v1020, 0.0
    %v1252 = vmax.f32 %v515, 0.0
    %v1253 = vmax.f32 %v684, 0.0
    %v1254 = vmax.f32 %v853, 0.0
    %v1255 = vmax.f32 %v1022, 0.0
    %v1256 = vmax.f32 %v518, 0.0
    %v1257 = vmax.f32 %v687, 0.0
    %v1258 = vmax.f32 %v856, 0.0
    %v1259 = vmax.f32 %v1025, 0.0
    %v1260 = vmax.f32 %v520, 0.0
    %v1261 = vmax.f32 %v689, 0.0
    %v1262 = vmax.f32 %v858, 0.0
    %v1263 = vmax.f32 %v1027, 0.0
    %v1264 = vmax.f32 %v523, 0.0
    %v1265 = vmax.f32 %v692, 0.0
    %v1266 = vmax.f32 %v861, 0.0
    %v1267 = vmax.f32 %v1030, 0.0
    %v1268 = vmax.f32 %v525, 0.0
    %v1269 = vmax.f32 %v694, 0.0
    %v1270 = vmax.f32 %v863, 0.0
    %v1271 = vmax.f32 %v1032, 0.0
    %v1272 = vmax.f32 %v528, 0.0
    %v1273 = vmax.f32 %v697, 0.0
    %v1274 = vmax.f32 %v866, 0.0
    %v1275 = vmax.f32 %v1035, 0.0
    %v1276 = vmax.f32 %v530, 0.0
    %v1277 = vmax.f32 %v699, 0.0
    %v1278 = vmax.f32 %v868, 0.0
    %v1279 = vmax.f32 %v1037, 0.0
    %v1280 = vmax.f32 %v533, 0.0
    %v1281 = vmax.f32 %v702, 0.0
    %v1282 = vmax.f32 %v871, 0.0
    %v1283 = vmax.f32 %v1040, 0.0
    %v1284 = vmax.f32 %v535, 0.0
    %v1285 = vmax.f32 %v704, 0.0
    %v1286 = vmax.f32 %v873, 0.0
    %v1287 = vmax.f32 %v1042, 0.0
    %v1288 = vmax.f32 %v538, 0.0
    %v1289 = vmax.f32 %v707, 0.0
    %v1290 = vmax.f32 %v876, 0.0
    %v1291 = vmax.f32 %v1045, 0.0
    %v1292 = vmax.f32 %v540, 0.0
    %v1293 = vmax.f32 %v709, 0.0
    %v1294 = vmax.f32 %v878, 0.0
    %v1295 = vmax.f32 %v1047, 0.0
    %v1296 = vmax.f32 %v543, 0.0
    %v1297 = vmax.f32 %v712, 0.0
    %v1298 = vmax.f32 %v881, 0.0
    %v1299 = vmax.f32 %v1050, 0.0
    %v1300 = vmax.f32 %v545, 0.0
    %v1301 = vmax.f32 %v714, 0.0
    %v1302 = vmax.f32 %v883, 0.0
    %v1303 = vmax.f32 %v1052, 0.0
    %v1304 = vmax.f32 %v548, 0.0
    %v1305 = vmax.f32 %v717, 0.0
    %v1306 = vmax.f32 %v886, 0.0
    %v1307 = vmax.f32 %v1055, 0.0
    %v1308 = vmax.f32 %v550, 0.0
    %v1309 = vmax.f32 %v719, 0.0
    %v1310 = vmax.f32 %v888, 0.0
    %v1311 = vmax.f32 %v1057, 0.0
    %v1312 = vmax.f32 %v553, 0.0
    %v1313 = vmax.f32 %v722, 0.0
    %v1314 = vmax.f32 %v891, 0.0
    %v1315 = vmax.f32 %v1060, 0.0
    %v1316 = vmax.f32 %v555, 0.0
    %v1317 = vmax.f32 %v724, 0.0
    %v1318 = vmax.f32 %v893, 0.0
    %v1319 = vmax.f32 %v1062, 0.0
    %v1320 = vadd.f32 %v1064, %v1068
    %v1321 = vadd.f32 %v1320, %v1072
    %v1322 = vadd.f32 %v1321, %v1076
    %v1323 = vadd.f32 %v1322, %v1080
    %v1324 = vadd.f32 %v1323, %v1084
    %v1325 = vadd.f32 %v1324, %v1088
    %v1326 = vadd.f32 %v1325, %v1092
    %v1327 = vadd.f32 %v1326, %v1096
    %v1328 = vadd.f32 %v1327, %v1100
    %v1329 = vadd.f32 %v1328, %v1104
    %v1330 = vadd.f32 %v1329, %v1108
    %v1331 = vadd.f32 %v1330, %v1112
    %v1332 = vadd.f32 %v1331, %v1116
    %v1333 = vadd.f32 %v1332, %v1120
    %v1334 = vadd.f32 %v1333, %v1124
    %v1335 = vadd.f32 %v1334, %v1128
    %v1336 = vadd.f32 %v1335, %v1132
    %v1337 = vadd.f32 %v1336, %v1136
    %v1338 = vadd.f32 %v1337, %v1140
    %v1339 = vadd.f32 %v1338, %v1144
    %v1340 = vadd.f32 %v1339, %v1148
    %v1341 = vadd.f32 %v1340, %v1152
    %v1342 = vadd.f32 %v1341, %v1156
    %v1343 = vadd.f32 %v1342, %v1160
    %v1344 = vadd.f32 %v1343, %v1164
    %v1345 = vadd.f32 %v1344, %v1168
    %v1346 = vadd.f32 %v1345, %v1172
    %v1347 = vadd.f32 %v1346, %v1176
    %v1348 = vadd.f32 %v1347, %v1180
    %v1349 = vadd.f32 %v1348, %v1184
    %v1350 = vadd.f32 %v1349, %v1188
    %v1351 = vrot.slane %v1350, 4
    %v1352 = vadd.f32 %v1350, %v1351
    %v1353 = vrot.slane %v1352, 2
    %v1354 = vadd.f32 %v1352, %v1353
    %v1355 = vrot.slane %v1354, 1
    %v1356 = vadd.f32 %v1354, %v1355
    %v1357 = vadd.f32 %v1065, %v1069
    %v1358 = vadd.f32 %v1357, %v1073
    %v1359 = vadd.f32 %v1358, %v1077
    %v1360 = vadd.f32 %v1359, %v1081
    %v1361 = vadd.f32 %v1360, %v1085
    %v1362 = vadd.f32 %v1361, %v1089
    %v1363 = vadd.f32 %v1362, %v1093
    %v1364 = vadd.f32 %v1363, %v1097
    %v1365 = vadd.f32 %v1364, %v1101
    %v1366 = vadd.f32 %v1365, %v1105
    %v1367 = vadd.f32 %v1366, %v1109
    %v1368 = vadd.f32 %v1367, %v1113
    %v1369 = vadd.f32 %v1368, %v1117
    %v1370 = vadd.f32 %v1369, %v1121
    %v1371 = vadd.f32 %v1370, %v1125
    %v1372 = vadd.f32 %v1371, %v1129
    %v1373 = vadd.f32 %v1372, %v1133
    %v1374 = vadd.f32 %v1373, %v1137
    %v1375 = vadd.f32 %v1374, %v1141
    %v1376 = vadd.f32 %v1375, %v1145
    %v1377 = vadd.f32 %v1376, %v1149
    %v1378 = vadd.f32 %v1377, %v1153
    %v1379 = vadd.f32 %v1378, %v1157
    %v1380 = vadd.f32 %v1379, %v1161
    %v1381 = vadd.f32 %v1380, %v1165
    %v1382 = vadd.f32 %v1381, %v1169
    %v1383 = vadd.f32 %v1382, %v1173
    %v1384 = vadd.f32 %v1383, %v1177
    %v1385 = vadd.f32 %v1384, %v1181
    %v1386 = vadd.f32 %v1385, %v1185
    %v1387 = vadd.f32 %v1386, %v1189
    %v1388 = vrot.slane %v1387, 4
    %v1389 = vadd.f32 %v1387, %v1388
    %v1390 = vrot.slane %v1389, 2
    %v1391 = vadd.f32 %v1389, %v1390
    %v1392 = vrot.slane %v1391, 1
    %v1393 = vadd.f32 %v1391, %v1392
    %v1394 = vadd.f32 %v1066, %v1070
    %v1395 = vadd.f32 %v1394, %v1074
    %v1396 = vadd.f32 %v1395, %v1078
    %v1397 = vadd.f32 %v1396, %v1082
    %v1398 = vadd.f32 %v1397, %v1086
    %v1399 = vadd.f32 %v1398, %v1090
    %v1400 = vadd.f32 %v1399, %v1094
    %v1401 = vadd.f32 %v1400, %v1098
    %v1402 = vadd.f32 %v1401, %v1102
    %v1403 = vadd.f32 %v1402, %v1106
    %v1404 = vadd.f32 %v1403, %v1110
    %v1405 = vadd.f32 %v1404, %v1114
    %v1406 = vadd.f32 %v1405, %v1118
    %v1407 = vadd.f32 %v1406, %v1122
    %v1408 = vadd.f32 %v1407, %v1126
    %v1409 = vadd.f32 %v1408, %v1130
    %v1410 = vadd.f32 %v1409, %v1134
    %v1411 = vadd.f32 %v1410, %v1138
    %v1412 = vadd.f32 %v1411, %v1142
    %v1413 = vadd.f32 %v1412, %v1146
    %v1414 = vadd.f32 %v1413, %v1150
    %v1415 = vadd.f32 %v1414, %v1154
    %v1416 = vadd.f32 %v1415, %v1158
    %v1417 = vadd.f32 %v1416, %v1162
    %v1418 = vadd.f32 %v1417, %v1166
    %v1419 = vadd.f32 %v1418, %v1170
    %v1420 = vadd.f32 %v1419, %v1174
    %v1421 = vadd.f32 %v1420, %v1178
    %v1422 = vadd.f32 %v1421, %v1182
    %v1423 = vadd.f32 %v1422, %v1186
    %v1424 = vadd.f32 %v1423, %v1190
    %v1425 = vrot.slane %v1424, 4
    %v1426 = vadd.f32 %v1424, %v1425
    %v1427 = vrot.slane %v1426, 2
    %v1428 = vadd.f32 %v1426, %v1427
    %v1429 = vrot.slane %v1428, 1
    %v1430 = vadd.f32 %v1428, %v1429
    %v1431 = vadd.f32 %v1067, %v1071
    %v1432 = vadd.f32 %v1431, %v1075
    %v1433 = vadd.f32 %v1432, %v1079
    %v1434 = vadd.f32 %v1433, %v1083
    %v1435 = vadd.f32 %v1434, %v1087
    %v1436 = vadd.f32 %v1435, %v1091
    %v1437 = vadd.f32 %v1436, %v1095
    %v1438 = vadd.f32 %v1437, %v1099
    %v1439 = vadd.f32 %v1438, %v1103
    %v1440 = vadd.f32 %v1439, %v1107
    %v1441 = vadd.f32 %v1440, %v1111
    %v1442 = vadd.f32 %v1441, %v1115
    %v1443 = vadd.f32 %v1442, %v1119
    %v1444 = vadd.f32 %v1443, %v1123
    %v1445 = vadd.f32 %v1444, %v1127
    %v1446 = vadd.f32 %v1445, %v1131
    %v1447 = vadd.f32 %v1446, %v1135
    %v1448 = vadd.f32 %v1447, %v1139
    %v1449 = vadd.f32 %v1448, %v1143
    %v1450 = vadd.f32 %v1449, %v1147
    %v1451 = vadd.f32 %v1450, %v1151
    %v1452 = vadd.f32 %v1451, %v1155
    %v1453 = vadd.f32 %v1452, %v1159
    %v1454 = vadd.f32 %v1453, %v1163
    %v1455 = vadd.f32 %v1454, %v1167
    %v1456 = vadd.f32 %v1455, %v1171
    %v1457 = vadd.f32 %v1456, %v1175
    %v1458 = vadd.f32 %v1457, %v1179
    %v1459 = vadd.f32 %v1458, %v1183
    %v1460 = vadd.f32 %v1459, %v1187
    %v1461 = vadd.f32 %v1460, %v1191
    %v1462 = vrot.slane %v1461, 4
    %v1463 = vadd.f32 %v1461, %v1462
    %v1464 = vrot.slane %v1463, 2
    %v1465 = vadd.f32 %v1463, %v1464
    %v1466 = vrot.slane %v1465, 1
    %v1467 = vadd.f32 %v1465, %v1466
    %v1468 = vadd.f32 %v1192, %v1196
    %v1469 = vadd.f32 %v1468, %v1200
    %v1470 = vadd.f32 %v1469, %v1204
    %v1471 = vadd.f32 %v1470, %v1208
    %v1472 = vadd.f32 %v1471, %v1212
    %v1473 = vadd.f32 %v1472, %v1216
    %v1474 = vadd.f32 %v1473, %v1220
    %v1475 = vadd.f32 %v1474, %v1224
    %v1476 = vadd.f32 %v1475, %v1228
    %v1477 = vadd.f32 %v1476, %v1232
    %v1478 = vadd.f32 %v1477, %v1236
    %v1479 = vadd.f32 %v1478, %v1240
    %v1480 = vadd.f32 %v1479, %v1244
    %v1481 = vadd.f32 %v1480, %v1248
    %v1482 = vadd.f32 %v1481, %v1252
    %v1483 = vadd.f32 %v1482, %v1256
    %v1484 = vadd.f32 %v1483, %v1260
    %v1485 = vadd.f32 %v1484, %v1264
    %v1486 = vadd.f32 %v1485, %v1268
    %v1487 = vadd.f32 %v1486, %v1272
    %v1488 = vadd.f32 %v1487, %v1276
    %v1489 = vadd.f32 %v1488, %v1280
    %v1490 = vadd.f32 %v1489, %v1284
    %v1491 = vadd.f32 %v1490, %v1288
    %v1492 = vadd.f32 %v1491, %v1292
    %v1493 = vadd.f32 %v1492, %v1296
    %v1494 = vadd.f32 %v1493, %v1300
    %v1495 = vadd.f32 %v1494, %v1304
    %v1496 = vadd.f32 %v1495, %v1308
    %v1497 = vadd.f32 %v1496, %v1312
    %v1498 = vadd.f32 %v1497, %v1316
    %v1499 = vrot.slane %v1498, 4
    %v1500 = vadd.f32 %v1498, %v1499
    %v1501 = vrot.slane %v1500, 2
    %v1502 = vadd.f32 %v1500, %v1501
    %v1503 = vrot.slane %v1502, 1
    %v1504 = vadd.f32 %v1502, %v1503
    %v1505 = vadd.f32 %v1193, %v1197
    %v1506 = vadd.f32 %v1505, %v1201
    %v1507 = vadd.f32 %v1506, %v1205
    %v1508 = vadd.f32 %v1507, %v1209
    %v1509 = vadd.f32 %v1508, %v1213
    %v1510 = vadd.f32 %v1509, %v1217
    %v1511 = vadd.f32 %v1510, %v1221
    %v1512 = vadd.f32 %v1511, %v1225
    %v1513 = vadd.f32 %v1512, %v1229
    %v1514 = vadd.f32 %v1513, %v1233
    %v1515 = vadd.f32 %v1514, %v1237
    %v1516 = vadd.f32 %v1515, %v1241
    %v1517 = vadd.f32 %v1516, %v1245
    %v1518 = vadd.f32 %v1517, %v1249
    %v1519 = vadd.f32 %v1518, %v1253
    %v1520 = vadd.f32 %v1519, %v1257
    %v1521 = vadd.f32 %v1520, %v1261
    %v1522 = vadd.f32 %v1521, %v1265
    %v1523 = vadd.f32 %v1522, %v1269
    %v1524 = vadd.f32 %v1523, %v1273
    %v1525 = vadd.f32 %v1524, %v1277
    %v1526 = vadd.f32 %v1525, %v1281
    %v1527 = vadd.f32 %v1526, %v1285
    %v1528 = vadd.f32 %v1527, %v1289
    %v1529 = vadd.f32 %v1528, %v1293
    %v1530 = vadd.f32 %v1529, %v1297
    %v1531 = vadd.f32 %v1530, %v1301
    %v1532 = vadd.f32 %v1531, %v1305
    %v1533 = vadd.f32 %v1532, %v1309
    %v1534 = vadd.f32 %v1533, %v1313
    %v1535 = vadd.f32 %v1534, %v1317
    %v1536 = vrot.slane %v1535, 4
    %v1537 = vadd.f32 %v1535, %v1536
    %v1538 = vrot.slane %v1537, 2
    %v1539 = vadd.f32 %v1537, %v1538
    %v1540 = vrot.slane %v1539, 1
    %v1541 = vadd.f32 %v1539, %v1540
    %v1542 = vadd.f32 %v1194, %v1198
    %v1543 = vadd.f32 %v1542, %v1202
    %v1544 = vadd.f32 %v1543, %v1206
    %v1545 = vadd.f32 %v1544, %v1210
    %v1546 = vadd.f32 %v1545, %v1214
    %v1547 = vadd.f32 %v1546, %v1218
    %v1548 = vadd.f32 %v1547, %v1222
    %v1549 = vadd.f32 %v1548, %v1226
    %v1550 = vadd.f32 %v1549, %v1230
    %v1551 = vadd.f32 %v1550, %v1234
    %v1552 = vadd.f32 %v1551, %v1238
    %v1553 = vadd.f32 %v1552, %v1242
    %v1554 = vadd.f32 %v1553, %v1246
    %v1555 = vadd.f32 %v1554, %v1250
    %v1556 = vadd.f32 %v1555, %v1254
    %v1557 = vadd.f32 %v1556, %v1258
    %v1558 = vadd.f32 %v1557, %v1262
    %v1559 = vadd.f32 %v1558, %v1266
    %v1560 = vadd.f32 %v1559, %v1270
    %v1561 = vadd.f32 %v1560, %v1274
    %v1562 = vadd.f32 %v1561, %v1278
    %v1563 = vadd.f32 %v1562, %v1282
    %v1564 = vadd.f32 %v1563, %v1286
    %v1565 = vadd.f32 %v1564, %v1290
    %v1566 = vadd.f32 %v1565, %v1294
    %v1567 = vadd.f32 %v1566, %v1298
    %v1568 = vadd.f32 %v1567, %v1302
    %v1569 = vadd.f32 %v1568, %v1306
    %v1570 = vadd.f32 %v1569, %v1310
    %v1571 = vadd.f32 %v1570, %v1314
    %v1572 = vadd.f32 %v1571, %v1318
    %v1573 = vrot.slane %v1572, 4
    %v1574 = vadd.f32 %v1572, %v1573
    %v1575 = vrot.slane %v1574, 2
    %v1576 = vadd.f32 %v1574, %v1575
    %v1577 = vrot.slane %v1576, 1
    %v1578 = vadd.f32 %v1576, %v1577
    %v1579 = vadd.f32 %v1195, %v1199
    %v1580 = vadd.f32 %v1579, %v1203
    %v1581 = vadd.f32 %v1580, %v1207
    %v1582 = vadd.f32 %v1581, %v1211
    %v1583 = vadd.f32 %v1582, %v1215
    %v1584 = vadd.f32 %v1583, %v1219
    %v1585 = vadd.f32 %v1584, %v1223
    %v1586 = vadd.f32 %v1585, %v1227
    %v1587 = vadd.f32 %v1586, %v1231
    %v1588 = vadd.f32 %v1587, %v1235
    %v1589 = vadd.f32 %v1588, %v1239
    %v1590 = vadd.f32 %v1589, %v1243
    %v1591 = vadd.f32 %v1590, %v1247
    %v1592 = vadd.f32 %v1591, %v1251
    %v1593 = vadd.f32 %v1592, %v1255
    %v1594 = vadd.f32 %v1593, %v1259
    %v1595 = vadd.f32 %v1594, %v1263
    %v1596 = vadd.f32 %v1595, %v1267
    %v1597 = vadd.f32 %v1596, %v1271
    %v1598 = vadd.f32 %v1597, %v1275
    %v1599 = vadd.f32 %v1598, %v1279
    %v1600 = vadd.f32 %v1599, %v1283
    %v1601 = vadd.f32 %v1600, %v1287
    %v1602 = vadd.f32 %v1601, %v1291
    %v1603 = vadd.f32 %v1602, %v1295
    %v1604 = vadd.f32 %v1603, %v1299
    %v1605 = vadd.f32 %v1604, %v1303
    %v1606 = vadd.f32 %v1605, %v1307
    %v1607 = vadd.f32 %v1606, %v1311
    %v1608 = vadd.f32 %v1607, %v1315
    %v1609 = vadd.f32 %v1608, %v1319
    %v1610 = vrot.slane %v1609, 4
    %v1611 = vadd.f32 %v1609, %v1610
    %v1612 = vrot.slane %v1611, 2
    %v1613 = vadd.f32 %v1611, %v1612
    %v1614 = vrot.slane %v1613, 1
    %v1615 = vadd.f32 %v1613, %v1614
    %v1616 = vld [vmem:[%s1 + $0x40] sm:$0xff]
    %v1617 = vld [vmem:[%s1 + $0x48] sm:$0xff]
    %v1618 = vld [vmem:[%s1 + $0x50] sm:$0xff]
    %v1619 = vld [vmem:[%s1 + $0x58] sm:$0xff]
    %v1620 = vpack.c.bf16 %v1356, %v1356
    %v1621 = vpack.c.bf16 %v1393, %v1393
    %v1622 = vpack.c.bf16 %v1430, %v1430
    %v1623 = vpack.c.bf16 %v1467, %v1467
    %v1624 = vpack.c.bf16 %v1504, %v1504
    %v1625 = vpack.c.bf16 %v1541, %v1541
    %v1626 = vpack.c.bf16 %v1578, %v1578
    %v1627 = vpack.c.bf16 %v1615, %v1615
    %v1636 = vunpack.c.l.b16 %v1620
    %v1637 = vunpack.c.l.b16 %v1621
    %v1638 = vunpack.c.l.b16 %v1622
    %v1639 = vunpack.c.l.b16 %v1623
    %v1640 = vunpack.c.l.b16 %v1624
    %v1641 = vunpack.c.l.b16 %v1625
    %v1642 = vunpack.c.l.b16 %v1626
    %v1643 = vunpack.c.l.b16 %v1627
    %vm1644 = vcmask 1041409
    %v1645 = vsel %vm1644, %v1640, %v1636
    %v1646 = vsel %vm1644, %v1641, %v1637
    %v1647 = vsel %vm1644, %v1642, %v1638
    %v1648 = vsel %vm1644, %v1643, %v1639
    %v1649 = vpack.c.b16 %v1645, %v1645
    %v1650 = vpack.c.b16 %v1646, %v1646
    %v1651 = vpack.c.b16 %v1647, %v1647
    %v1652 = vpack.c.b16 %v1648, %v1648
    %v1661 = vunpack.c.l.b16 %v1616
    %v1662 = vunpack.c.h.b16 %v1616
    %v1663 = vunpack.c.l.b16 %v1617
    %v1664 = vunpack.c.h.b16 %v1617
    %v1665 = vunpack.c.l.b16 %v1618
    %v1666 = vunpack.c.h.b16 %v1618
    %v1667 = vunpack.c.l.b16 %v1619
    %v1668 = vunpack.c.h.b16 %v1619
    %v1669 = vpack.c.b16 %v1665, %v1661
    %v1670 = vpack.c.b16 %v1666, %v1662
    %v1671 = vpack.c.b16 %v1667, %v1663
    %v1672 = vpack.c.b16 %v1668, %v1664
    %1677 = vmatpush.bf16.xpose.msra.mxu0 0
    %1678 = vmatpush.bf16.xpose.msra.mxu0 0
    %1679 = vmatpush.bf16.xpose.msra.mxu0 0
    %1680 = vmatpush.bf16.xpose.msra.mxu0 0
    %1681 = vmatpush.bf16.xpose.msra.mxu0 0
    %1682 = vmatpush.bf16.xpose.msra.mxu0 0
    %1683 = vmatpush.bf16.xpose.msra.mxu0 0
    %1684 = vmatpush.bf16.xpose.msra.mxu0 %v1669
    %1685 = vmatmul.bf16.gmra.mxu0 %v1649
    %v1686 = vpop.f32.mrf.mxu0
    %v1687 = vadd.f32 0.0, %v1686
    %v1688 = vpop.f32.mrf.mxu0
    %1689 = vdwg.mxu0
    %1690 = vmatpush.bf16.xpose.msra.mxu0 0
    %1691 = vmatpush.bf16.xpose.msra.mxu0 0
    %1692 = vmatpush.bf16.xpose.msra.mxu0 0
    %1693 = vmatpush.bf16.xpose.msra.mxu0 0
    %1694 = vmatpush.bf16.xpose.msra.mxu0 0
    %1695 = vmatpush.bf16.xpose.msra.mxu0 0
    %1696 = vmatpush.bf16.xpose.msra.mxu0 0
    %1697 = vmatpush.bf16.xpose.msra.mxu0 %v1670
    %1698 = vmatmul.bf16.gmra.mxu0 %v1650
    %v1699 = vpop.f32.mrf.mxu0
    %v1700 = vadd.f32 %v1687, %v1699
    %v1701 = vpop.f32.mrf.mxu0
    %1702 = vdwg.mxu0
    %1703 = vmatpush.bf16.xpose.msra.mxu0 0
    %1704 = vmatpush.bf16.xpose.msra.mxu0 0
    %1705 = vmatpush.bf16.xpose.msra.mxu0 0
    %1706 = vmatpush.bf16.xpose.msra.mxu0 0
    %1707 = vmatpush.bf16.xpose.msra.mxu0 0
    %1708 = vmatpush.bf16.xpose.msra.mxu0 0
    %1709 = vmatpush.bf16.xpose.msra.mxu0 0
    %1710 = vmatpush.bf16.xpose.msra.mxu0 %v1671
    %1711 = vmatmul.bf16.gmra.mxu0 %v1651
    %v1712 = vpop.f32.mrf.mxu0
    %v1713 = vadd.f32 %v1700, %v1712
    %v1714 = vpop.f32.mrf.mxu0
    %1715 = vdwg.mxu0
    %1716 = vmatpush.bf16.xpose.msra.mxu0 0
    %1717 = vmatpush.bf16.xpose.msra.mxu0 0
    %1718 = vmatpush.bf16.xpose.msra.mxu0 0
    %1719 = vmatpush.bf16.xpose.msra.mxu0 0
    %1720 = vmatpush.bf16.xpose.msra.mxu0 0
    %1721 = vmatpush.bf16.xpose.msra.mxu0 0
    %1722 = vmatpush.bf16.xpose.msra.mxu0 0
    %1723 = vmatpush.bf16.xpose.msra.mxu0 %v1672
    %1724 = vmatmul.bf16.gmra.mxu0 %v1652
    %v1725 = vpop.f32.mrf.mxu0
    %v1726 = vadd.f32 %v1713, %v1725
    %v1727 = vpop.f32.mrf.mxu0
    %1728 = vdwg.mxu0
    %v1729 = vld [vmem:[%s2] sm:$0xff]
    %v1730 = vld [vmem:[%s2 + $0x8] sm:$0xff]
    %v1731 = vld [vmem:[%s2 + $0x10] sm:$0xff]
    %v1732 = vld [vmem:[%s2 + $0x18] sm:$0xff]
    %v1733 = vld [vmem:[%s2 + $0x20] sm:$0xff]
    %v1734 = vld [vmem:[%s2 + $0x28] sm:$0xff]
    %v1735 = vld [vmem:[%s2 + $0x30] sm:$0xff]
    %v1736 = vld [vmem:[%s2 + $0x38] sm:$0xff]
    %v1737 = vld [vmem:[%s2 + $0x40] sm:$0xff]
    %v1738 = vld [vmem:[%s2 + $0x48] sm:$0xff]
    %v1739 = vld [vmem:[%s3] sm:$0x3]
    %v1740 = vpack.c.bf16 %v1739, %v1739
    %v1741 = vpack.c.bf16 %v1729, %v1729
    %v1742 = vperm.slane %v1730, 0
    %vm1743 = vcmask 23552
    %v1745 = vsel %vm1743, %v1740, 0
    %vm1747 = vcmask 1040384
    %vm1748 = vcmask 1041408
    %v1749 = vsel %vm1747, 4294967295, 65535
    %v1750 = vsel %vm1748, %v1749, 0
    %v1752 = vand.u32 %v1741, %v1750
    %1754 = vmatpush.bf16.msra.mxu0 0
    %1755 = vmatpush.bf16.msra.mxu0 0
    %1756 = vmatpush.bf16.msra.mxu0 0
    %1757 = vmatpush.bf16.msra.mxu0 0
    %1758 = vmatpush.bf16.msra.mxu0 0
    %1759 = vmatpush.bf16.msra.mxu0 0
    %1760 = vmatpush.bf16.msra.mxu0 0
    %1761 = vmatpush.bf16.msra.mxu0 %v1752
    %1762 = vmatmul.bf16.gmra.mxu0 %v1745
    %v1763 = vpop.f32.mrf.mxu0
    %v1764 = vadd.f32 %v1742, %v1763
    %v1765 = vpop.f32.mrf.mxu0
    %1766 = vdwg.mxu0
    %v1767 = vmax.f32 %v1764, 0.0
    %v1768 = vpack.c.bf16 %v1767, %v1767
    %v1769 = vpack.c.bf16 %v1732, %v1731
    %v1770 = vpack.c.bf16 %v1734, %v1733
    %v1771 = vperm.slane %v1735, 0
    %v1773 = vsel %vm291, %v1768, 0
    %1775 = vmatpush.bf16.msra.mxu0 0
    %1776 = vmatpush.bf16.msra.mxu0 0
    %1777 = vmatpush.bf16.msra.mxu0 0
    %1778 = vmatpush.bf16.msra.mxu0 0
    %1779 = vmatpush.bf16.msra.mxu0 0
    %1780 = vmatpush.bf16.msra.mxu0 0
    %1781 = vmatpush.bf16.msra.mxu0 %v1770
    %1782 = vmatpush.bf16.msra.mxu0 %v1769
    %1783 = vmatmul.bf16.gmra.mxu0 %v1773
    %v1784 = vpop.f32.mrf.mxu0
    %v1785 = vadd.f32 %v1771, %v1784
    %v1786 = vpop.f32.mrf.mxu0
    %1787 = vdwg.mxu0
    %v1788 = vmax.f32 %v1785, 0.0
    %v1789 = vpack.c.bf16 %v1788, %v1788
    %v1790 = vpack.c.bf16 %v1737, %v1736
    %vm1791 = vcmask 130048
    %v1793 = vsel %vm1791, %v1789, 0
    %1795 = vmatpush.bf16.msra.mxu0 0
    %1796 = vmatpush.bf16.msra.mxu0 0
    %1797 = vmatpush.bf16.msra.mxu0 0
    %1798 = vmatpush.bf16.msra.mxu0 0
    %1799 = vmatpush.bf16.msra.mxu0 0
    %1800 = vmatpush.bf16.msra.mxu0 0
    %1801 = vmatpush.bf16.msra.mxu0 0
    %1802 = vmatpush.bf16.msra.mxu0 %v1790
    %1803 = vmatmul.bf16.gmra.mxu0 %v1793
    %v1804 = vpop.f32.mrf.mxu0
    %v1805 = vadd.f32 0.0, %v1804
    %v1806 = vpop.f32.mrf.mxu0
    %1807 = vdwg.mxu0
    %v1808 = vadd.f32 %v1726, %v1805
    %v1809 = vperm.slane %v1738, 0
    %v1810 = vadd.f32 %v1808, %v1809
    %vm1811 = vcmask 17408
    %1812 = vst.msk [vmem:[#allocation2] sm:$0x3] %vm1811, %v1810
    // Predicated region
    $region18: #{forward.1} parent=1 // pred_check
      _
    $region19: #{forward.1} parent=1 // pred_check_branch
      %1814 = sbr.rel (0) target = $region21
    $region20: #{forward.1} parent=1 // pred_region
      %1816 = vsyncadd [#allocation3], 0
      %s1818 = sshll.u32 [#allocation2], 4
      %s1819 = int_to_ptr.vmem [resolvable:$true] %s1818
      %s1820 = sshll.u32 %s4, 4
      %s1821 = int_to_ptr.hbm [resolvable:$true] %s1820
      %1823 = dma.vmem_to_hbm [thread:$0]  %s1819, 32, %s1821, [#allocation3]
    $region21: #{forward.1} parent=1 // pred_fallthru
      _
    // Predicated region
    $region22: #{forward.1} parent=1 // pred_check
      _
    $region23: #{forward.1} parent=1 // pred_check_branch
      %1825 = sbr.rel (0) target = $region25
    $region24: #{forward.1} parent=1 // pred_region
      %1827 = dma.done [#allocation3], 32
    $region25: #{forward.1} parent=1 // pred_fallthru
      _
    %1828 = vsyncpa [#allocation3], 1

</llo_original>
